<compile_context>
chip_gen: v5e
topology: v5e:2x2
jax: 0.10.0
libtpu: 0.0.40
codegen_flags: <defaults>
</compile_context>

<pallas_src>
import functools

import jax
import jax.numpy as jnp
from jax.experimental import pallas as pl
from jax.experimental.pallas import tpu as pltpu


def _rup(v, m):
    return ((v + m - 1) // m) * m


def _cdiv(a, b):
    return -(-a // b)


# --------------------------------------------------------------------------------------
# Hardware-aware VMEM budgeting
# --------------------------------------------------------------------------------------
def _query_vmem_cap():
    try:
        info = pltpu.get_tpu_info()
        cap = getattr(info, "vmem_capacity_bytes", None)
        if cap:
            return int(cap)
    except Exception:
        pass
    return 64 * 1024 * 1024                       # conservative (v7x physical VMEM)


_VMEM_CAP = _query_vmem_cap()
_VMEM_LIMIT = int(min(_VMEM_CAP * 6 // 10, 64 * 1024 * 1024))
_DIRECT_BUDGET = int(_VMEM_LIMIT * 3 // 4)

_PARAMS_GRID2 = pltpu.CompilerParams(
    dimension_semantics=("parallel", "parallel"), vmem_limit_bytes=_VMEM_LIMIT)
_PARAMS_GRID1 = pltpu.CompilerParams(
    dimension_semantics=("parallel",), vmem_limit_bytes=_VMEM_LIMIT)


# --------------------------------------------------------------------------------------
# Pallas kernels
# --------------------------------------------------------------------------------------
def _apply_act(y, act):
    if act == "hard_swish":                       # x * relu6(x + 3) / 6  (nn.Hardswish)
        return y * jnp.clip(y + 3.0, 0.0, 6.0) * (1.0 / 6.0)
    if act == "linear":
        return y
    raise ValueError(act)


def _load_tap(x_ref, base, shift, tm):
    """Load rows [base+shift, base+shift+tm) of the flattened padded image.

    `base` is a multiple of tm (tm is a multiple of 16); the dynamic start is kept
    16-aligned (bf16 sublane tile) and the sub-tile residual is a static value slice.
    """
    q, r = divmod(shift, 16)
    start = pl.multiple_of(base + 16 * q, 16)
    if r == 0:
        return x_ref[0, pl.ds(start, tm), :]
    v = x_ref[0, pl.ds(start, tm + 16), :]
    return jax.lax.slice_in_dim(v, r, r + tm, axis=0)


def _tap_accumulate(x_ref, w_ref, b_ref, k, row_stride, tm):
    base = pl.multiple_of(pl.program_id(1) * tm, 16)
    acc = None
    for t in range(k * k):
        di, dj = divmod(t, k)
        shift = di * row_stride + dj
        xt = _load_tap(x_ref, base, shift, tm)                    # (tm, Cin) bf16
        y = jnp.dot(xt, w_ref[t], preferred_element_type=jnp.float32)
        acc = y if acc is None else acc + y
    return acc + b_ref[...]                                       # f32 (tm, N)


def _conv_tap_kernel(x_ref, w_ref, b_ref, o_ref, *, k, row_stride, tm, act):
    """Direct stride-1 conv as tap accumulation; BN pre-folded into w, epilogue = +b, act."""
    y = _tap_accumulate(x_ref, w_ref, b_ref, k, row_stride, tm)
    o_ref[0] = _apply_act(y, act).astype(o_ref.dtype)


def _conv_tap_pred_kernel(x_ref, w_ref, b_ref, wp_ref, bp_ref, o_ref, *, k, row_stride, tm, act):
    """Tower 3x3 conv fused with its 1x1 prediction head (tower activation stays in VMEM)."""
    y = _tap_accumulate(x_ref, w_ref, b_ref, k, row_stride, tm)
    hidden = _apply_act(y, act).astype(jnp.bfloat16)
    pred = jnp.dot(hidden, wp_ref[...], preferred_element_type=jnp.float32) + bp_ref[...]
    o_ref[0] = pred.astype(o_ref.dtype)


def _mm_kernel(*refs, n_in, act):
    """Multi-input fused 1x1 conv / matmul:  out = act( sum_i x_i @ W_i + b )."""
    x_refs = refs[:n_in]
    w_refs = refs[n_in:2 * n_in]
    b_ref = refs[2 * n_in]
    o_ref = refs[2 * n_in + 1]
    acc = None
    for xr, wr in zip(x_refs, w_refs):
        y = jnp.dot(xr[...], wr[...], preferred_element_type=jnp.float32)
        acc = y if acc is None else acc + y
    o_ref[...] = _apply_act(acc + b_ref[...], act).astype(o_ref.dtype)


def _decode_kernel(o_ref, g_ref, s_ref, out_ref):
    # YOLOX eval decode: xy = (o[:2]+grid)*stride ; wh = exp(o[2:4])*stride ; obj/cls = sigmoid
    o = o_ref[...]
    g = g_ref[...]
    s = s_ref[...]
    col = jax.lax.broadcasted_iota(jnp.int32, o.shape, 2)
    is_xy = col < 2
    is_wh = jnp.logical_and(col >= 2, col < 4)
    box_xy = (o + g) * s
    box_wh = jnp.exp(jnp.where(is_wh, o, 0.0)) * s      # exp only where used
    sig = jax.nn.sigmoid(o)
    out_ref[...] = jnp.where(is_xy, box_xy, jnp.where(is_wh, box_wh, sig))


# --------------------------------------------------------------------------------------
# Convolution wrappers
# --------------------------------------------------------------------------------------
def _choose_tiles(m_rows, quantum=8, target=512):
    mt = max(1, int(round(m_rows / target)))
    tm = _rup(_cdiv(m_rows, mt), quantum)
    return tm, mt, tm * mt


def _direct_bytes(tot_rows, cin, n, k, tm, npred):
    lane = lambda c: _rup(c, 128)
    x_b = 2 * _rup(tot_rows, 16) * lane(cin) * 2          # double-buffered bf16 image block
    w_b = 2 * k * k * _rup(cin, 16) * lane(n) * 2
    nout = npred if npred else n
    o_b = 2 * _rup(tm, 16) * lane(nout) * 4
    acc = 2 * _rup(tm, 16) * lane(n) * 4
    wp_b = 2 * _rup(n, 16) * lane(npred) * 2 if npred else 0
    return x_b + w_b + o_b + acc + wp_b


def _conv_direct(x, w, bias, k, pad, act, out_dtype, tm, mt, mp, eh, tot_rows, pred=None):
    """Per-image direct conv, grid=(B, M-tiles); padded image fully VMEM-resident."""
    B, H, W, C = x.shape
    N = w.shape[-1]
    Hp, Wp = H + 2 * pad, W + 2 * pad
    Ho, Wo = Hp - k + 1, Wp - k + 1
    n_rows = Hp * Wp

    x = x.astype(jnp.bfloat16)
    # single pad: spatial 'same' padding + bottom rows covering tile round-up and tap shifts
    x = jnp.pad(x, ((0, 0), (pad, pad + eh), (pad, pad), (0, 0)))
    xf = x.reshape(B, tot_rows, C)
    w3 = w.reshape(k * k, C, N)                                   # bf16, BN folded
    b2 = bias.reshape(1, N).astype(jnp.float32)

    if pred is None:
        kern = functools.partial(_conv_tap_kernel, k=k, row_stride=Wp, tm=tm, act=act)
        in_specs = [
            pl.BlockSpec((1, tot_rows, C), lambda b, m: (b, 0, 0)),
            pl.BlockSpec((k * k, C, N), lambda b, m: (0, 0, 0)),
            pl.BlockSpec((1, N), lambda b, m: (0, 0)),
        ]
        args = (xf, w3, b2)
        n_out, o_dtype = N, out_dtype
    else:
        wp, bp = pred
        npred = wp.shape[-1]
        kern = functools.partial(_conv_tap_pred_kernel, k=k, row_stride=Wp, tm=tm, act=act)
        in_specs = [
            pl.BlockSpec((1, tot_rows, C), lambda b, m: (b, 0, 0)),
            pl.BlockSpec((k * k, C, N), lambda b, m: (0, 0, 0)),
            pl.BlockSpec((1, N), lambda b, m: (0, 0)),
            pl.BlockSpec((N, npred), lambda b, m: (0, 0)),
            pl.BlockSpec((1, npred), lambda b, m: (0, 0)),
        ]
        args = (xf, w3, b2, wp.astype(jnp.bfloat16),
                bp.reshape(1, npred).astype(jnp.float32))
        n_out, o_dtype = npred, jnp.float32

    out = pl.pallas_call(
        kern,
        out_shape=jax.ShapeDtypeStruct((B, mp, n_out), o_dtype),
        grid=(B, mt),
        in_specs=in_specs,
        out_specs=pl.BlockSpec((1, tm, n_out), lambda b, m: (b, m, 0)),
        compiler_params=_PARAMS_GRID2,
    )(*args)

    out = out[:, :n_rows, :].reshape(B, Hp, Wp, n_out)
    if (Ho, Wo) != (Hp, Wp):
        out = out[:, :Ho, :Wo, :]
    return out


def conv1x1_fused(xs, ws, bias, act, out_dtype):
    """Multi-input fused 1x1 conv: xs NHWC tensors (implicit channel concat), ws[i]: (Ci, Ntot)."""
    B, H, W = xs[0].shape[:3]
    M = B * H * W
    Ntot = ws[0].shape[-1]
    tm, mt, mp = _choose_tiles(M)

    flats = []
    for x in xs:
        xf = x.astype(jnp.bfloat16).reshape(M, x.shape[-1])
        if mp != M:
            xf = jnp.pad(xf, ((0, mp - M), (0, 0)))
        flats.append(xf)

    in_specs = []
    for xf in flats:
        c = xf.shape[-1]
        in_specs.append(pl.BlockSpec((tm, c), lambda m: (m, 0)))
    for wi in ws:
        c = wi.shape[0]
        in_specs.append(pl.BlockSpec((c, Ntot), lambda m: (0, 0)))
    in_specs.append(pl.BlockSpec((1, Ntot), lambda m: (0, 0)))

    out = pl.pallas_call(
        functools.partial(_mm_kernel, n_in=len(xs), act=act),
        out_shape=jax.ShapeDtypeStruct((mp, Ntot), out_dtype),
        grid=(mt,),
        in_specs=in_specs,
        out_specs=pl.BlockSpec((tm, Ntot), lambda m: (m, 0)),
        compiler_params=_PARAMS_GRID1,
    )(*flats, *[wi.astype(jnp.bfloat16) for wi in ws],
      bias.reshape(1, Ntot).astype(jnp.float32))

    if mp != M:
        out = out[:M]
    return out.reshape(B, H, W, Ntot)


def _extract_patches_s1(x, k, pad):
    B, H, W, C = x.shape
    if pad:
        x = jnp.pad(x, ((0, 0), (pad, pad), (pad, pad), (0, 0)))
    Hp, Wp = H + 2 * pad, W + 2 * pad
    Ho, Wo = Hp - k + 1, Wp - k + 1
    cols = [x[:, di:di + Ho, dj:dj + Wo, :] for di in range(k) for dj in range(k)]
    return jnp.concatenate(cols, axis=-1), Ho, Wo


def _conv_im2col(x, w, bias, k, pad, act, out_dtype):
    # TODO(synk): large-width configs would need a K grid axis + f32 acc scratch here.
    N = w.shape[-1]
    patches, _, _ = _extract_patches_s1(x.astype(jnp.bfloat16), k, pad)
    K = patches.shape[-1]
    return conv1x1_fused([patches], [w.reshape(K, N)], bias, act, out_dtype)


def conv2d_s1(x, w, bias, k, pad, act, out_dtype, pred=None):
    """stride-1 k x k conv + folded-BN bias + activation (+ optional fused 1x1 pred head)."""
    B, H, W, C = x.shape
    N = w.shape[-1]
    Hp, Wp = H + 2 * pad, W + 2 * pad
    n_rows = Hp * Wp
    tm, mt, mp = _choose_tiles(n_rows, quantum=16)
    ext = (k - 1) * Wp + (k - 1)
    need = mp + ext + 16
    eh = _cdiv(need - n_rows, Wp)
    tot_rows = (Hp + eh) * Wp
    npred = pred[0].shape[-1] if pred is not None else 0

    if _direct_bytes(tot_rows, C, N, k, tm, npred) <= _DIRECT_BUDGET:
        return _conv_direct(x, w, bias, k, pad, act, out_dtype,
                            tm=tm, mt=mt, mp=mp, eh=eh, tot_rows=tot_rows, pred=pred)

    # rare fallback: per-image block too big for VMEM -> tiled im2col matmul
    y = _conv_im2col(x, w, bias, k, pad, act, jnp.bfloat16 if pred is not None else out_dtype)
    if pred is not None:
        wp, bp = pred
        return conv1x1_fused([y], [wp], bp, "linear", jnp.float32)
    return y


# stride-2 3x3 conv == stride-1 2x2 conv on a phase-stacked (space-to-depth) input
def _phase_stack(x):
    return jnp.concatenate([x[:, 0::2, 0::2, :], x[:, 0::2, 1::2, :],
                            x[:, 1::2, 0::2, :], x[:, 1::2, 1::2, :]], axis=-1)


def _stride2_weights_to_phase(w):
    _, _, cin, n = w.shape
    w4 = jnp.pad(w, ((0, 1), (0, 1), (0, 0), (0, 0)))
    w4 = w4.reshape(2, 2, 2, 2, cin, n)
    w4 = jnp.transpose(w4, (0, 2, 1, 3, 4, 5))
    return w4.reshape(2, 2, 4 * cin, n)


def base_conv(p, x, stride=1, act="hard_swish", out_dtype=jnp.bfloat16, pred=None):
    w, b, k = p["w"], p["b"], p["k"]
    if stride == 2:
        assert k == 3, "only 3x3 stride-2 convs occur in this network"
        assert x.shape[1] % 2 == 0 and x.shape[2] % 2 == 0
        xp = jnp.pad(x.astype(jnp.bfloat16), ((0, 0), (1, 1), (1, 1), (0, 0)))
        x = _phase_stack(xp)
        w = _stride2_weights_to_phase(w)
        k, pad = 2, 0
    elif stride == 1:
        pad = (k - 1) // 2
    else:
        raise ValueError(stride)
    if k == 1 and pred is None:
        cin = w.shape[-2]
        return conv1x1_fused([x], [w.reshape(cin, -1)], b, act, out_dtype)
    return conv2d_s1(x, w, b, k, pad, act, out_dtype, pred=pred)


def decode_outputs(outputs, grid_pad, stride_all):
    B, A, D = outputs.shape
    return pl.pallas_call(
        _decode_kernel,
        out_shape=jax.ShapeDtypeStruct((B, A, D), jnp.float32),
        grid=(B,),
        in_specs=[
            pl.BlockSpec((1, A, D), lambda b: (b, 0, 0)),
            pl.BlockSpec((1, A, D), lambda b: (0, 0, 0)),
            pl.BlockSpec((1, A, 1), lambda b: (0, 0, 0)),
        ],
        out_specs=pl.BlockSpec((1, A, D), lambda b: (b, 0, 0)),
        compiler_params=_PARAMS_GRID1,
    )(outputs, grid_pad, stride_all)


# --------------------------------------------------------------------------------------
# Parameter generation (deterministic, synthetic; BN folded into weights, pre-cast bf16)
# --------------------------------------------------------------------------------------
class ParamGen:
    def __init__(self, seed=0):
        self._key = jax.random.PRNGKey(seed)

    def _next(self):
        self._key, sub = jax.random.split(self._key)
        return sub

    def conv_bn(self, cin, cout, k):
        fan = k * k * cin
        w = jax.random.normal(self._next(), (k, k, cin, cout), jnp.float32) / jnp.sqrt(fan)
        s = 1.0 + 0.1 * jax.random.normal(self._next(), (cout,), jnp.float32)
        b = 0.1 * jax.random.normal(self._next(), (cout,), jnp.float32)
        return {"w": (w * s).astype(jnp.bfloat16), "b": b, "k": k}

    def conv_bias(self, cin, cout, k=1):
        fan = k * k * cin
        w = jax.random.normal(self._next(), (k, k, cin, cout), jnp.float32) / jnp.sqrt(fan)
        b = 0.01 * jax.random.normal(self._next(), (cout,), jnp.float32)
        return {"w": w.astype(jnp.bfloat16), "b": b, "k": k}


# --------------------------------------------------------------------------------------
# Layer building blocks
# --------------------------------------------------------------------------------------
def make_bottleneck(pg, cin, cout, shortcut, expansion=1.0):
    hidden = int(cout * expansion)
    return {"conv1": pg.conv_bn(cin, hidden, 1),
            "conv2": pg.conv_bn(hidden, cout, 3),
            "shortcut": bool(shortcut and cin == cout)}


def bottleneck(p, x):
    y = base_conv(p["conv1"], x)
    y = base_conv(p["conv2"], y)
    if p["shortcut"]:
        y = y + x
    return y


def make_csp(pg, cin, cout, n, shortcut):
    hidden = int(cout * 0.5)
    return {"conv1": pg.conv_bn(cin, hidden, 1),
            "conv2": pg.conv_bn(cin, hidden, 1),
            "conv3": pg.conv_bn(2 * hidden, cout, 1),
            "m": [make_bottleneck(pg, hidden, hidden, shortcut) for _ in range(n)]}


def csp_layer(p, xs):
    if not isinstance(xs, (list, tuple)):
        xs = [xs]
    hidden = p["conv1"]["w"].shape[-1]
    # conv1 + conv2 fused along N (shared input); input channel-concat fused via multi-input kernel
    w1 = p["conv1"]["w"].reshape(-1, hidden)
    w2 = p["conv2"]["w"].reshape(-1, hidden)
    w12 = jnp.concatenate([w1, w2], axis=-1)
    b12 = jnp.concatenate([p["conv1"]["b"], p["conv2"]["b"]])
    slabs, off = [], 0
    for x in xs:
        c = x.shape[-1]
        slabs.append(w12[off:off + c])
        off += c
    y = conv1x1_fused(xs, slabs, b12, "hard_swish", jnp.bfloat16)
    x1, x2 = y[..., :hidden], y[..., hidden:]
    for bp in p["m"]:
        x1 = bottleneck(bp, x1)
    w3 = p["conv3"]["w"].reshape(2 * hidden, -1)
    return conv1x1_fused([x1, x2], [w3[:hidden], w3[hidden:]],
                         p["conv3"]["b"], "hard_swish", jnp.bfloat16)


def make_spp(pg, cin, cout, ks=(5, 9, 13)):
    hidden = cin // 2
    return {"conv1": pg.conv_bn(cin, hidden, 1),
            "conv2": pg.conv_bn(hidden * (len(ks) + 1), cout, 1),
            "ks": ks}


def max_pool_same(x, k):
    # TODO(synk): SPP max-pool stays as plain-JAX reduce_window glue.
    pad = k // 2
    neg_inf = jnp.asarray(-jnp.inf, x.dtype)
    return jax.lax.reduce_window(x, neg_inf, jax.lax.max,
                                 (1, k, k, 1), (1, 1, 1, 1),
                                 ((0, 0), (pad, pad), (pad, pad), (0, 0)))


def spp(p, x):
    x = base_conv(p["conv1"], x)
    feats = [x] + [max_pool_same(x, k) for k in p["ks"]]
    hidden = x.shape[-1]
    w2 = p["conv2"]["w"].reshape(hidden * len(feats), -1)
    slabs = [w2[i * hidden:(i + 1) * hidden] for i in range(len(feats))]
    return conv1x1_fused(feats, slabs, p["conv2"]["b"], "hard_swish", jnp.bfloat16)


def focus(p, x):
    tl = x[:, ::2, ::2, :]
    bl = x[:, 1::2, ::2, :]
    tr = x[:, ::2, 1::2, :]
    br = x[:, 1::2, 1::2, :]
    return base_conv(p["conv"], jnp.concatenate([tl, bl, tr, br], axis=-1))


def upsample2x(x):
    # TODO(synk): nearest-upsample + concat could be folded into the consuming 1x1 conv.
    return jnp.repeat(jnp.repeat(x, 2, axis=1), 2, axis=2)


# --------------------------------------------------------------------------------------
# Backbone (CSPDarknet-P6), PAFPN-P6, YOLOX head
# --------------------------------------------------------------------------------------
def build_backbone(pg, width, depth):
    base = int(64 * width)
    bd = max(round(3 * depth), 1)
    c3, c4, c5, c6 = int(256 * width), int(512 * width), int(768 * width), int(1024 * width)
    p = {}
    p["stem"] = {"conv": pg.conv_bn(12, base, 3)}
    p["dark2_conv"] = pg.conv_bn(base, base * 2, 3)
    p["dark2_csp"] = make_csp(pg, base * 2, base * 2, bd, True)
    p["dark3_conv"] = pg.conv_bn(base * 2, c3, 3)
    p["dark3_csp"] = make_csp(pg, c3, c3, 3 * bd, True)
    p["dark4_conv"] = pg.conv_bn(c3, c4, 3)
    p["dark4_csp"] = make_csp(pg, c4, c4, 3 * bd, True)
    p["dark5_conv"] = pg.conv_bn(c4, c5, 3)
    p["dark5_csp"] = make_csp(pg, c5, c5, 3 * bd, True)  # TODO(synk): exact P6 stage depth unverified
    p["dark6_conv"] = pg.conv_bn(c5, c6, 3)
    p["dark6_spp"] = make_spp(pg, c6, c6)
    p["dark6_csp"] = make_csp(pg, c6, c6, bd, False)
    return p


def backbone_forward(p, x):
    x = focus(p["stem"], x)
    x = csp_layer(p["dark2_csp"], base_conv(p["dark2_conv"], x, stride=2))
    d3 = csp_layer(p["dark3_csp"], base_conv(p["dark3_conv"], x, stride=2))
    d4 = csp_layer(p["dark4_csp"], base_conv(p["dark4_conv"], d3, stride=2))
    d5 = csp_layer(p["dark5_csp"], base_conv(p["dark5_conv"], d4, stride=2))
    d6 = base_conv(p["dark6_conv"], d5, stride=2)
    d6 = spp(p["dark6_spp"], d6)
    d6 = csp_layer(p["dark6_csp"], d6)
    return d3, d4, d5, d6


def build_pafpn(pg, width, depth):
    c3, c4, c5, c6 = int(256 * width), int(512 * width), int(768 * width), int(1024 * width)
    bd = max(round(3 * depth), 1)
    p = {}
    p["lateral_c6"] = pg.conv_bn(c6, c5, 1)
    p["csp_p5"] = make_csp(pg, 2 * c5, c5, bd, False)
    p["lateral_c5"] = pg.conv_bn(c5, c4, 1)
    p["csp_p4"] = make_csp(pg, 2 * c4, c4, bd, False)
    p["lateral_c4"] = pg.conv_bn(c4, c3, 1)
    p["csp_p3"] = make_csp(pg, 2 * c3, c3, bd, False)
    p["bu_conv3"] = pg.conv_bn(c3, c3, 3)
    p["csp_n3"] = make_csp(pg, 2 * c3, c4, bd, False)
    p["bu_conv4"] = pg.conv_bn(c4, c4, 3)
    p["csp_n4"] = make_csp(pg, 2 * c4, c5, bd, False)
    p["bu_conv5"] = pg.conv_bn(c5, c5, 3)
    p["csp_n5"] = make_csp(pg, 2 * c5, c6, bd, False)
    return p


def pafpn_forward(p, feats):
    d3, d4, d5, d6 = feats
    x6 = base_conv(p["lateral_c6"], d6)
    p5 = csp_layer(p["csp_p5"], [upsample2x(x6), d5])
    x5 = base_conv(p["lateral_c5"], p5)
    p4 = csp_layer(p["csp_p4"], [upsample2x(x5), d4])
    x4 = base_conv(p["lateral_c4"], p4)
    p3 = csp_layer(p["csp_p3"], [upsample2x(x4), d3])
    n3 = csp_layer(p["csp_n3"], [base_conv(p["bu_conv3"], p3, stride=2), x4])
    n4 = csp_layer(p["csp_n4"], [base_conv(p["bu_conv4"], n3, stride=2), x5])
    n5 = csp_layer(p["csp_n5"], [base_conv(p["bu_conv5"], n4, stride=2), x6])
    return p3, n3, n4, n5


def build_head(pg, width, num_classes, in_channels=(256, 512, 768, 1024)):
    hidden = int(256 * width)
    levels = []
    for c in in_channels:
        cin = int(c * width)
        levels.append({
            "stem": pg.conv_bn(cin, hidden, 1),
            "cls_convs": [pg.conv_bn(hidden, hidden, 3), pg.conv_bn(hidden, hidden, 3)],
            "reg_convs": [pg.conv_bn(hidden, hidden, 3), pg.conv_bn(hidden, hidden, 3)],
            # reg_pred(4) + obj_pred(1) fused into one 1x1 conv; order [reg, obj] preserved
            "regobj_pred": pg.conv_bias(hidden, 4 + 1, 1),
            "cls_pred": pg.conv_bias(hidden, num_classes, 1),
        })
    return {"levels": levels, "strides": (8, 16, 32, 64), "num_classes": num_classes}


def head_forward(p, feats):
    outs, grids, stride_maps = [], [], []
    for lvl, (feat, stride) in enumerate(zip(feats, p["strides"])):
        lp = p["levels"][lvl]
        x = base_conv(lp["stem"], feat)
        hidden = lp["cls_convs"][0]["w"].shape[-1]
        # first cls_conv + first reg_conv share the stem output -> one 3x3 conv with N=2*hidden
        w_cat = jnp.concatenate([lp["cls_convs"][0]["w"], lp["reg_convs"][0]["w"]], axis=-1)
        b_cat = jnp.concatenate([lp["cls_convs"][0]["b"], lp["reg_convs"][0]["b"]], axis=0)
        cr = base_conv({"w": w_cat, "b": b_cat, "k": 3}, x)
        c, r = cr[..., :hidden], cr[..., hidden:]
        # second tower conv fused with its 1x1 pred head (tower activation never hits HBM)
        cls_out = base_conv(lp["cls_convs"][1], c,
                            pred=(lp["cls_pred"]["w"].reshape(hidden, -1), lp["cls_pred"]["b"]))
        regobj = base_conv(lp["reg_convs"][1], r,
                           pred=(lp["regobj_pred"]["w"].reshape(hidden, -1), lp["regobj_pred"]["b"]))
        out = jnp.concatenate([regobj, cls_out], axis=-1)        # [reg(4), obj(1), cls(C)]
        B, H, W, D = out.shape
        outs.append(out.reshape(B, H * W, D))
        yv, xv = jnp.meshgrid(jnp.arange(H), jnp.arange(W), indexing="ij")
        grids.append(jnp.stack([xv, yv], axis=-1).reshape(1, H * W, 2).astype(jnp.float32))
        stride_maps.append(jnp.full((1, H * W, 1), float(stride), jnp.float32))
    outputs = jnp.concatenate(outs, axis=1)         # [B, A, 5+C]
    grid_all = jnp.concatenate(grids, axis=1)       # [1, A, 2]
    stride_all = jnp.concatenate(stride_maps, axis=1)
    D = outputs.shape[-1]
    grid_pad = jnp.pad(grid_all, ((0, 0), (0, 0), (0, D - 2)))
    return decode_outputs(outputs, grid_pad, stride_all)


class YOLOXP6v2:
    """Eval-mode forward: NCHW image -> decoded detections [B, n_anchors_all, 5 + num_classes]."""

    def __init__(self, depth=1.0 / 3.0, width=1.0 / 16.0, num_classes=80, seed=0):
        pg = ParamGen(seed)
        self.backbone_p = build_backbone(pg, width, depth)
        self.pafpn_p = build_pafpn(pg, width, depth)
        self.head_p = build_head(pg, width, num_classes)

    def __call__(self, x_nchw):
        x = jnp.transpose(x_nchw, (0, 2, 3, 1))     # NCHW -> NHWC
        feats = backbone_forward(self.backbone_p, x)
        fpn = pafpn_forward(self.pafpn_p, feats)
        return head_forward(self.head_p, fpn)


# --------------------------------------------------------------------------------------
# Self checks (kernel math vs plain-JAX f32 reference conv)
# --------------------------------------------------------------------------------------
def _reference_conv(p, x, stride, act):
    k = p["k"]
    pad = (k - 1) // 2
    y = jax.lax.conv_general_dilated(
        x.astype(jnp.float32), p["w"].astype(jnp.float32),
        window_strides=(stride, stride), padding=((pad, pad), (pad, pad)),
        dimension_numbers=("NHWC", "HWIO", "NHWC"))
    return _apply_act(y + p["b"], act)


def _assert_close(got, ref, name, tol=0.08):
    rel = float(jnp.max(jnp.abs(got - ref))) / (float(jnp.max(jnp.abs(ref))) + 1e-6)
    assert rel < tol, f"{name} self-check failed (rel err {rel})"


def _self_check():
    pg = ParamGen(123)
    key = jax.random.PRNGKey(7)
    k1, k2, k3 = jax.random.split(key, 3)
    x = jax.random.normal(k1, (2, 12, 12, 8), jnp.float32)
    p3 = pg.conv_bn(8, 16, 3)
    for stride in (1, 2):   # stride 1 -> direct tap kernel; stride 2 -> phase-stack rewrite
        got = base_conv(p3, x, stride=stride).astype(jnp.float32)
        ref = _reference_conv(p3, x, stride, "hard_swish")
        _assert_close(got, ref, f"3x3 stride={stride}")
    # fused tower(3x3) + pred(1x1) head kernel
    pp = pg.conv_bias(16, 5, 1)
    got = base_conv(p3, x, pred=(pp["w"].reshape(16, 5), pp["b"]))
    tref = _reference_conv(p3, x, 1, "hard_swish")
    pref = _reference_conv(pp, tref, 1, "linear")
    _assert_close(got, pref, "tower+pred fusion")
    # multi-input fused 1x1 conv (concat fusion)
    xa = jax.random.normal(k2, (2, 8, 8, 8), jnp.float32)
    xb = jax.random.normal(k3, (2, 8, 8, 4), jnp.float32)
    p1 = pg.conv_bn(12, 16, 1)
    w = p1["w"].reshape(12, 16)
    got = conv1x1_fused([xa, xb], [w[:8], w[8:]], p1["b"],
                        "hard_swish", jnp.bfloat16).astype(jnp.float32)
    ref = _reference_conv(p1, jnp.concatenate([xa, xb], axis=-1), 1, "hard_swish")
    _assert_close(got, ref, "multi-input 1x1 fusion")


if __name__ == "__main__":
    _self_check()
    key = jax.random.PRNGKey(0)
    # small synthetic config: batch=2, 128x128 RGB, width=1/16, depth=1/3, 80 classes
    x = jax.random.normal(key, (2, 3, 128, 128), jnp.float32)
    model = YOLOXP6v2(depth=1.0 / 3.0, width=1.0 / 16.0, num_classes=80, seed=0)
    fwd = jax.jit(model.__call__)
    out = jax.block_until_ready(fwd(x))
    assert out.shape == (2, 16 * 16 + 8 * 8 + 4 * 4 + 2 * 2, 85), out.shape
    assert bool(jnp.all(jnp.isfinite(out)))
    print("KERNEL_OK")
</pallas_src>

<mosaic_0001>
module attributes {stable_mosaic.version = 11 : i64} {
  func.func @_conv_tap_kernel(%arg0: i32, %arg1: i32, %arg2: memref<1x266x8xbf16, #tpu.memory_space<vmem>>, %arg3: memref<9x8x16xbf16, #tpu.memory_space<vmem>>, %arg4: memref<1x16xf32, #tpu.memory_space<vmem>>, %arg5: memref<1x208x16xbf16, #tpu.memory_space<vmem>>) attributes {dimension_semantics = [#tpu.dimension_semantics<parallel>, #tpu.dimension_semantics<parallel>], iteration_bounds = array<i64: 2, 1>, scalar_prefetch = 0 : i64, scratch_operands = 0 : i64, tpu.core_type = #tpu.core_type<tc>, window_params = [{transform_indices = @transform_0, window_bounds = array<i64: 1, 266, 8>}, {pipeline_mode = #tpu.pipeline_mode<synchronous>, transform_indices = @transform_1, window_bounds = array<i64: 9, 8, 16>}, {pipeline_mode = #tpu.pipeline_mode<synchronous>, transform_indices = @transform_2, window_bounds = array<i64: 1, 16>}, {transform_indices = @transform_3, window_bounds = array<i64: 1, 208, 16>}]} {
    %c208_i32 = arith.constant 208 : i32
    %0 = arith.muli %arg1, %c208_i32 : i32
    %1 = tpu.assume_multiple %0, 16 : i32
    %c0_i32 = arith.constant 0 : i32
    %2 = arith.addi %1, %c0_i32 : i32
    %3 = tpu.assume_multiple %2, 16 : i32
    %c0 = arith.constant 0 : index
    %4 = arith.index_cast %3 : i32 to index
    %c0_0 = arith.constant 0 : index
    %5 = vector.load %arg2[%c0, %4, %c0_0] : memref<1x266x8xbf16, #tpu.memory_space<vmem>>, vector<1x208x8xbf16>
    %6 = vector.shape_cast %5 : vector<1x208x8xbf16> to vector<208x8xbf16>
    %c0_1 = arith.constant 0 : index
    %c0_2 = arith.constant 0 : index
    %c0_3 = arith.constant 0 : index
    %7 = vector.load %arg3[%c0_1, %c0_2, %c0_3] : memref<9x8x16xbf16, #tpu.memory_space<vmem>>, vector<1x8x16xbf16>
    %8 = vector.shape_cast %7 : vector<1x8x16xbf16> to vector<8x16xbf16>
    %cst = arith.constant dense<0.000000e+00> : vector<208x16xf32>
    %9 = tpu.matmul %6, %8, %cst {dimension_numbers = #tpu.dot_dimension_numbers<[1], [0], [0], [1], [0, 0, 1, 1], [], []>} : vector<208x8xbf16>, vector<8x16xbf16>, vector<208x16xf32> -> vector<208x16xf32>
    %c0_i32_4 = arith.constant 0 : i32
    %10 = arith.addi %1, %c0_i32_4 : i32
    %11 = tpu.assume_multiple %10, 16 : i32
    %c0_5 = arith.constant 0 : index
    %12 = arith.index_cast %11 : i32 to index
    %c0_6 = arith.constant 0 : index
    %13 = vector.load %arg2[%c0_5, %12, %c0_6] : memref<1x266x8xbf16, #tpu.memory_space<vmem>>, vector<1x224x8xbf16>
    %14 = vector.shape_cast %13 : vector<1x224x8xbf16> to vector<224x8xbf16>
    %15 = vector.extract_strided_slice %14 {offsets = [1, 0], sizes = [208, 8], strides = [1, 1]} : vector<224x8xbf16> to vector<208x8xbf16>
    %c1 = arith.constant 1 : index
    %c0_7 = arith.constant 0 : index
    %c0_8 = arith.constant 0 : index
    %16 = vector.load %arg3[%c1, %c0_7, %c0_8] : memref<9x8x16xbf16, #tpu.memory_space<vmem>>, vector<1x8x16xbf16>
    %17 = vector.shape_cast %16 : vector<1x8x16xbf16> to vector<8x16xbf16>
    %cst_9 = arith.constant dense<0.000000e+00> : vector<208x16xf32>
    %18 = tpu.matmul %15, %17, %cst_9 {dimension_numbers = #tpu.dot_dimension_numbers<[1], [0], [0], [1], [0, 0, 1, 1], [], []>} : vector<208x8xbf16>, vector<8x16xbf16>, vector<208x16xf32> -> vector<208x16xf32>
    %19 = arith.addf %9, %18 : vector<208x16xf32>
    %c0_i32_10 = arith.constant 0 : i32
    %20 = arith.addi %1, %c0_i32_10 : i32
    %21 = tpu.assume_multiple %20, 16 : i32
    %c0_11 = arith.constant 0 : index
    %22 = arith.index_cast %21 : i32 to index
    %c0_12 = arith.constant 0 : index
    %23 = vector.load %arg2[%c0_11, %22, %c0_12] : memref<1x266x8xbf16, #tpu.memory_space<vmem>>, vector<1x224x8xbf16>
    %24 = vector.shape_cast %23 : vector<1x224x8xbf16> to vector<224x8xbf16>
    %25 = vector.extract_strided_slice %24 {offsets = [2, 0], sizes = [208, 8], strides = [1, 1]} : vector<224x8xbf16> to vector<208x8xbf16>
    %c2 = arith.constant 2 : index
    %c0_13 = arith.constant 0 : index
    %c0_14 = arith.constant 0 : index
    %26 = vector.load %arg3[%c2, %c0_13, %c0_14] : memref<9x8x16xbf16, #tpu.memory_space<vmem>>, vector<1x8x16xbf16>
    %27 = vector.shape_cast %26 : vector<1x8x16xbf16> to vector<8x16xbf16>
    %cst_15 = arith.constant dense<0.000000e+00> : vector<208x16xf32>
    %28 = tpu.matmul %25, %27, %cst_15 {dimension_numbers = #tpu.dot_dimension_numbers<[1], [0], [0], [1], [0, 0, 1, 1], [], []>} : vector<208x8xbf16>, vector<8x16xbf16>, vector<208x16xf32> -> vector<208x16xf32>
    %29 = arith.addf %19, %28 : vector<208x16xf32>
    %c0_i32_16 = arith.constant 0 : i32
    %30 = arith.addi %1, %c0_i32_16 : i32
    %31 = tpu.assume_multiple %30, 16 : i32
    %c0_17 = arith.constant 0 : index
    %32 = arith.index_cast %31 : i32 to index
    %c0_18 = arith.constant 0 : index
    %33 = vector.load %arg2[%c0_17, %32, %c0_18] : memref<1x266x8xbf16, #tpu.memory_space<vmem>>, vector<1x224x8xbf16>
    %34 = vector.shape_cast %33 : vector<1x224x8xbf16> to vector<224x8xbf16>
    %35 = vector.extract_strided_slice %34 {offsets = [14, 0], sizes = [208, 8], strides = [1, 1]} : vector<224x8xbf16> to vector<208x8xbf16>
    %c3 = arith.constant 3 : index
    %c0_19 = arith.constant 0 : index
    %c0_20 = arith.constant 0 : index
    %36 = vector.load %arg3[%c3, %c0_19, %c0_20] : memref<9x8x16xbf16, #tpu.memory_space<vmem>>, vector<1x8x16xbf16>
    %37 = vector.shape_cast %36 : vector<1x8x16xbf16> to vector<8x16xbf16>
    %cst_21 = arith.constant dense<0.000000e+00> : vector<208x16xf32>
    %38 = tpu.matmul %35, %37, %cst_21 {dimension_numbers = #tpu.dot_dimension_numbers<[1], [0], [0], [1], [0, 0, 1, 1], [], []>} : vector<208x8xbf16>, vector<8x16xbf16>, vector<208x16xf32> -> vector<208x16xf32>
    %39 = arith.addf %29, %38 : vector<208x16xf32>
    %c0_i32_22 = arith.constant 0 : i32
    %40 = arith.addi %1, %c0_i32_22 : i32
    %41 = tpu.assume_multiple %40, 16 : i32
    %c0_23 = arith.constant 0 : index
    %42 = arith.index_cast %41 : i32 to index
    %c0_24 = arith.constant 0 : index
    %43 = vector.load %arg2[%c0_23, %42, %c0_24] : memref<1x266x8xbf16, #tpu.memory_space<vmem>>, vector<1x224x8xbf16>
    %44 = vector.shape_cast %43 : vector<1x224x8xbf16> to vector<224x8xbf16>
    %45 = vector.extract_strided_slice %44 {offsets = [15, 0], sizes = [208, 8], strides = [1, 1]} : vector<224x8xbf16> to vector<208x8xbf16>
    %c4 = arith.constant 4 : index
    %c0_25 = arith.constant 0 : index
    %c0_26 = arith.constant 0 : index
    %46 = vector.load %arg3[%c4, %c0_25, %c0_26] : memref<9x8x16xbf16, #tpu.memory_space<vmem>>, vector<1x8x16xbf16>
    %47 = vector.shape_cast %46 : vector<1x8x16xbf16> to vector<8x16xbf16>
    %cst_27 = arith.constant dense<0.000000e+00> : vector<208x16xf32>
    %48 = tpu.matmul %45, %47, %cst_27 {dimension_numbers = #tpu.dot_dimension_numbers<[1], [0], [0], [1], [0, 0, 1, 1], [], []>} : vector<208x8xbf16>, vector<8x16xbf16>, vector<208x16xf32> -> vector<208x16xf32>
    %49 = arith.addf %39, %48 : vector<208x16xf32>
    %c16_i32 = arith.constant 16 : i32
    %50 = arith.addi %1, %c16_i32 : i32
    %51 = tpu.assume_multiple %50, 16 : i32
    %c0_28 = arith.constant 0 : index
    %52 = arith.index_cast %51 : i32 to index
    %c0_29 = arith.constant 0 : index
    %53 = vector.load %arg2[%c0_28, %52, %c0_29] : memref<1x266x8xbf16, #tpu.memory_space<vmem>>, vector<1x208x8xbf16>
    %54 = vector.shape_cast %53 : vector<1x208x8xbf16> to vector<208x8xbf16>
    %c5 = arith.constant 5 : index
    %c0_30 = arith.constant 0 : index
    %c0_31 = arith.constant 0 : index
    %55 = vector.load %arg3[%c5, %c0_30, %c0_31] : memref<9x8x16xbf16, #tpu.memory_space<vmem>>, vector<1x8x16xbf16>
    %56 = vector.shape_cast %55 : vector<1x8x16xbf16> to vector<8x16xbf16>
    %cst_32 = arith.constant dense<0.000000e+00> : vector<208x16xf32>
    %57 = tpu.matmul %54, %56, %cst_32 {dimension_numbers = #tpu.dot_dimension_numbers<[1], [0], [0], [1], [0, 0, 1, 1], [], []>} : vector<208x8xbf16>, vector<8x16xbf16>, vector<208x16xf32> -> vector<208x16xf32>
    %58 = arith.addf %49, %57 : vector<208x16xf32>
    %c16_i32_33 = arith.constant 16 : i32
    %59 = arith.addi %1, %c16_i32_33 : i32
    %60 = tpu.assume_multiple %59, 16 : i32
    %c0_34 = arith.constant 0 : index
    %61 = arith.index_cast %60 : i32 to index
    %c0_35 = arith.constant 0 : index
    %62 = vector.load %arg2[%c0_34, %61, %c0_35] : memref<1x266x8xbf16, #tpu.memory_space<vmem>>, vector<1x224x8xbf16>
    %63 = vector.shape_cast %62 : vector<1x224x8xbf16> to vector<224x8xbf16>
    %64 = vector.extract_strided_slice %63 {offsets = [12, 0], sizes = [208, 8], strides = [1, 1]} : vector<224x8xbf16> to vector<208x8xbf16>
    %c6 = arith.constant 6 : index
    %c0_36 = arith.constant 0 : index
    %c0_37 = arith.constant 0 : index
    %65 = vector.load %arg3[%c6, %c0_36, %c0_37] : memref<9x8x16xbf16, #tpu.memory_space<vmem>>, vector<1x8x16xbf16>
    %66 = vector.shape_cast %65 : vector<1x8x16xbf16> to vector<8x16xbf16>
    %cst_38 = arith.constant dense<0.000000e+00> : vector<208x16xf32>
    %67 = tpu.matmul %64, %66, %cst_38 {dimension_numbers = #tpu.dot_dimension_numbers<[1], [0], [0], [1], [0, 0, 1, 1], [], []>} : vector<208x8xbf16>, vector<8x16xbf16>, vector<208x16xf32> -> vector<208x16xf32>
    %68 = arith.addf %58, %67 : vector<208x16xf32>
    %c16_i32_39 = arith.constant 16 : i32
    %69 = arith.addi %1, %c16_i32_39 : i32
    %70 = tpu.assume_multiple %69, 16 : i32
    %c0_40 = arith.constant 0 : index
    %71 = arith.index_cast %70 : i32 to index
    %c0_41 = arith.constant 0 : index
    %72 = vector.load %arg2[%c0_40, %71, %c0_41] : memref<1x266x8xbf16, #tpu.memory_space<vmem>>, vector<1x224x8xbf16>
    %73 = vector.shape_cast %72 : vector<1x224x8xbf16> to vector<224x8xbf16>
    %74 = vector.extract_strided_slice %73 {offsets = [13, 0], sizes = [208, 8], strides = [1, 1]} : vector<224x8xbf16> to vector<208x8xbf16>
    %c7 = arith.constant 7 : index
    %c0_42 = arith.constant 0 : index
    %c0_43 = arith.constant 0 : index
    %75 = vector.load %arg3[%c7, %c0_42, %c0_43] : memref<9x8x16xbf16, #tpu.memory_space<vmem>>, vector<1x8x16xbf16>
    %76 = vector.shape_cast %75 : vector<1x8x16xbf16> to vector<8x16xbf16>
    %cst_44 = arith.constant dense<0.000000e+00> : vector<208x16xf32>
    %77 = tpu.matmul %74, %76, %cst_44 {dimension_numbers = #tpu.dot_dimension_numbers<[1], [0], [0], [1], [0, 0, 1, 1], [], []>} : vector<208x8xbf16>, vector<8x16xbf16>, vector<208x16xf32> -> vector<208x16xf32>
    %78 = arith.addf %68, %77 : vector<208x16xf32>
    %c16_i32_45 = arith.constant 16 : i32
    %79 = arith.addi %1, %c16_i32_45 : i32
    %80 = tpu.assume_multiple %79, 16 : i32
    %c0_46 = arith.constant 0 : index
    %81 = arith.index_cast %80 : i32 to index
    %c0_47 = arith.constant 0 : index
    %82 = vector.load %arg2[%c0_46, %81, %c0_47] : memref<1x266x8xbf16, #tpu.memory_space<vmem>>, vector<1x224x8xbf16>
    %83 = vector.shape_cast %82 : vector<1x224x8xbf16> to vector<224x8xbf16>
    %84 = vector.extract_strided_slice %83 {offsets = [14, 0], sizes = [208, 8], strides = [1, 1]} : vector<224x8xbf16> to vector<208x8xbf16>
    %c8 = arith.constant 8 : index
    %c0_48 = arith.constant 0 : index
    %c0_49 = arith.constant 0 : index
    %85 = vector.load %arg3[%c8, %c0_48, %c0_49] : memref<9x8x16xbf16, #tpu.memory_space<vmem>>, vector<1x8x16xbf16>
    %86 = vector.shape_cast %85 : vector<1x8x16xbf16> to vector<8x16xbf16>
    %cst_50 = arith.constant dense<0.000000e+00> : vector<208x16xf32>
    %87 = tpu.matmul %84, %86, %cst_50 {dimension_numbers = #tpu.dot_dimension_numbers<[1], [0], [0], [1], [0, 0, 1, 1], [], []>} : vector<208x8xbf16>, vector<8x16xbf16>, vector<208x16xf32> -> vector<208x16xf32>
    %88 = arith.addf %78, %87 : vector<208x16xf32>
    %c0_51 = arith.constant 0 : index
    %c0_52 = arith.constant 0 : index
    %89 = vector.load %arg4[%c0_51, %c0_52] : memref<1x16xf32, #tpu.memory_space<vmem>>, vector<1x16xf32>
    %90 = vector.broadcast %89 : vector<1x16xf32> to vector<208x16xf32>
    %91 = arith.addf %88, %90 : vector<208x16xf32>
    %cst_53 = arith.constant 3.000000e+00 : f32
    %92 = vector.broadcast %cst_53 : f32 to vector<208x16xf32>
    %93 = arith.addf %91, %92 : vector<208x16xf32>
    %cst_54 = arith.constant 0.000000e+00 : f32
    %cst_55 = arith.constant 6.000000e+00 : f32
    %94 = vector.broadcast %cst_54 : f32 to vector<208x16xf32>
    %95 = arith.maximumf %94, %93 : vector<208x16xf32>
    %96 = vector.broadcast %cst_55 : f32 to vector<208x16xf32>
    %97 = arith.minimumf %96, %95 : vector<208x16xf32>
    %98 = arith.mulf %91, %97 : vector<208x16xf32>
    %cst_56 = arith.constant 0.166666672 : f32
    %99 = vector.broadcast %cst_56 : f32 to vector<208x16xf32>
    %100 = arith.mulf %98, %99 : vector<208x16xf32>
    %101 = arith.truncf %100 : vector<208x16xf32> to vector<208x16xbf16>
    %c0_57 = arith.constant 0 : index
    %c0_58 = arith.constant 0 : index
    %c0_59 = arith.constant 0 : index
    %102 = vector.load %arg5[%c0_57, %c0_58, %c0_59] : memref<1x208x16xbf16, #tpu.memory_space<vmem>>, vector<1x208x16xbf16>
    %103 = vector.shape_cast %102 : vector<1x208x16xbf16> to vector<208x16xbf16>
    %104 = vector.shape_cast %101 : vector<208x16xbf16> to vector<1x208x16xbf16>
    tpu.vector_store %arg5[%c0_57, %c0_58, %c0_59], %104 {strides = array<i32>} : memref<1x208x16xbf16, #tpu.memory_space<vmem>>, vector<1x208x16xbf16>,
    return
  }
  func.func @transform_0(%arg0: i32, %arg1: i32) -> (i32, i32, i32) {
    %c0_i32 = arith.constant 0 : i32
    %c0_i32_0 = arith.constant 0 : i32
    %c0_i32_1 = arith.constant 0 : i32
    return %arg0, %c0_i32, %c0_i32_0 : i32, i32, i32
  }
  func.func @transform_1(%arg0: i32, %arg1: i32) -> (i32, i32, i32) {
    %c0_i32 = arith.constant 0 : i32
    %c0_i32_0 = arith.constant 0 : i32
    %c0_i32_1 = arith.constant 0 : i32
    %c0_i32_2 = arith.constant 0 : i32
    return %c0_i32, %c0_i32_0, %c0_i32_1 : i32, i32, i32
  }
  func.func @transform_2(%arg0: i32, %arg1: i32) -> (i32, i32) {
    %c0_i32 = arith.constant 0 : i32
    %c0_i32_0 = arith.constant 0 : i32
    %c0_i32_1 = arith.constant 0 : i32
    return %c0_i32, %c0_i32_0 : i32, i32
  }
  func.func @transform_3(%arg0: i32, %arg1: i32) -> (i32, i32, i32) {
    %c0_i32 = arith.constant 0 : i32
    %c0_i32_0 = arith.constant 0 : i32
    return %arg0, %arg1, %c0_i32 : i32, i32, i32
  }
}

</mosaic_0001>

<llo_original>
// kernel: tpu_custom_call.1
$region0: #{tpu_custom_call.1}
  #allocation0 [shape = 'u32[]', space=smem, size = 0x4, offset = 0x4, fixed_abs, tag = 'smem constant byte address 0x4 - core index']
  #allocation1 [shape = 'u32[72,128]{1,0:T(1,128)}', space=vmem, size = 0x9000, scoped, tag = 'internal scratch']
  %s0 = inlined_call_operand.vmem [shape: bf16[2,266,8], index: 0, kind: input, shape index: {}]
  %s1 = inlined_call_operand.vmem [shape: bf16[9,8,16], index: 1, kind: input, shape index: {}]
  %s2 = inlined_call_operand.vmem [shape: f32[1,16], index: 2, kind: input, shape index: {}]
  %s3 = inlined_call_operand.vmem [shape: bf16[2,208,16], index: 3, kind: output, shape index: {}]
  %s4 = sld [smem:[#allocation0]]
  $region45: #{tpu_custom_call.1} parent=0
    _
  %s6 = ssub.s32 1, %s4
  %s7 = scalar_select 0, %s6, %s4
  loop: start=0, step=1, limit=4
  $region2: #{tpu_custom_call.1} parent=0 // loop_pre_header
    _
  $region3: #{tpu_custom_call.1} parent=0 // loop_header
    %s9 = sphi 0, %s13
    %p10 = scmp.ge.s32.totalorder %s9, 4
    %s16 = sphi 0, %s28
    %s17 = sphi 0, %s24
    %s18 = sphi 0, %s16
    %s19 = sphi 0, %s17
    %s20 = sphi 0, %s18
    %s21 = sphi 0, %s19
    %s31 = sphi 0, %s33
    %s34 = sphi 0, %s31
    %s35 = sphi 0, %s34
    %s51 = sphi 0, %s35
    %s55 = sphi 0, %s55
    %s57 = sphi 0, %s55
    %s58 = sphi 0, %s57
    %s72 = sphi 0, %s58
    %s76 = sphi 0, %s76
    %s78 = sphi 0, %s76
    %s79 = sphi 0, %s78
    %s93 = sphi 0, %s79
    %s101 = sphi 0, %s103
    %s104 = sphi 0, %s101
    %s105 = sphi 0, %s104
    %s121 = sphi 0, %s105
  $region4: #{tpu_custom_call.1} parent=0 // loop_header_branch
    %12 = sbr.rel (%p10) target = $region8
  $region5: #{tpu_custom_call.1} parent=0 // loop_body
    %s14 = ssub.s32 %s9, 1
    %s15 = ssub.s32 %s9, 2
    %s22 = sadd.s32 1, %s17
    %p23 = scmp.ge.s32.totalorder %s22, 1
    %s24 = scalar_select %p23, 0, %s22
    %s25 = sadd.s32 1, %s16
    %s26 = scalar_select %p23, %s25, %s16
    %p27 = scmp.ge.s32.totalorder %s26, 2
    %s28 = scalar_select %p27, 0, %s26
    %s29 = ssub.s32 %s16, %s28
    %p30 = scmp.eq.s32.totalorder %s29, 0
    %s32 = sadd.s32 %s31, 1
    %s33 = scalar_select %p30, %s31, %s32
    %p36 = pneg %p30
    %p37 = scmp.eq.s32.totalorder %s9, 1
    %p38 = por %p36, %p37
    %p39 = scmp.ne.s32.totalorder %s31, %s34
    %p40 = scmp.eq.s32.totalorder %s9, 0
    %p41 = por %p39, %p40
    %p42 = scmp.ne.s32.totalorder %s31, %s34
    %p43 = scmp.eq.s32.totalorder %s14, 1
    %p44 = por %p42, %p43
    %p45 = scmp.ne.s32.totalorder %s34, %s35
    %p46 = scmp.eq.s32.totalorder %s14, 0
    %p47 = por %p45, %p46
    %p48 = scmp.ne.s32.totalorder %s34, %s35
    %p49 = scmp.eq.s32.totalorder %s15, 1
    %p50 = por %p48, %p49
    %p52 = scmp.ne.s32.totalorder %s35, %s51
    %p53 = scmp.eq.s32.totalorder %s15, 0
    %p54 = por %p52, %p53
    %s56 = sadd.s32 %s55, 1
    %p59 = scmp.eq.s32.totalorder %s9, 1
    %p60 = scmp.ne.s32.totalorder %s55, %s57
    %p61 = scmp.eq.s32.totalorder %s9, 0
    %p62 = por %p60, %p61
    %p63 = scmp.ne.s32.totalorder %s55, %s57
    %p64 = scmp.eq.s32.totalorder %s14, 1
    %p65 = por %p63, %p64
    %p66 = scmp.ne.s32.totalorder %s57, %s58
    %p67 = scmp.eq.s32.totalorder %s14, 0
    %p68 = por %p66, %p67
    %p69 = scmp.ne.s32.totalorder %s57, %s58
    %p70 = scmp.eq.s32.totalorder %s15, 1
    %p71 = por %p69, %p70
    %p73 = scmp.ne.s32.totalorder %s58, %s72
    %p74 = scmp.eq.s32.totalorder %s15, 0
    %p75 = por %p73, %p74
    %s77 = sadd.s32 %s76, 1
    %p80 = scmp.eq.s32.totalorder %s9, 1
    %p81 = scmp.ne.s32.totalorder %s76, %s78
    %p82 = scmp.eq.s32.totalorder %s9, 0
    %p83 = por %p81, %p82
    %p84 = scmp.ne.s32.totalorder %s76, %s78
    %p85 = scmp.eq.s32.totalorder %s14, 1
    %p86 = por %p84, %p85
    %p87 = scmp.ne.s32.totalorder %s78, %s79
    %p88 = scmp.eq.s32.totalorder %s14, 0
    %p89 = por %p87, %p88
    %p90 = scmp.ne.s32.totalorder %s78, %s79
    %p91 = scmp.eq.s32.totalorder %s15, 1
    %p92 = por %p90, %p91
    %p94 = scmp.ne.s32.totalorder %s79, %s93
    %p95 = scmp.eq.s32.totalorder %s15, 0
    %p96 = por %p94, %p95
    %s97 = ssub.s32 %s16, %s28
    %s98 = ssub.s32 %s17, %s24
    %s99 = sor.u32 %s97, %s98
    %p100 = scmp.eq.s32.totalorder %s99, 0
    %s102 = sadd.s32 %s101, 1
    %s103 = scalar_select %p100, %s101, %s102
    %p106 = pneg %p100
    %p107 = scmp.eq.s32.totalorder %s9, 1
    %p108 = por %p106, %p107
    %p109 = scmp.ne.s32.totalorder %s101, %s104
    %p110 = scmp.eq.s32.totalorder %s9, 0
    %p111 = por %p109, %p110
    %p112 = scmp.ne.s32.totalorder %s101, %s104
    %p113 = scmp.eq.s32.totalorder %s14, 1
    %p114 = por %p112, %p113
    %p115 = scmp.ne.s32.totalorder %s104, %s105
    %p116 = scmp.eq.s32.totalorder %s14, 0
    %p117 = por %p115, %p116
    %p118 = scmp.ne.s32.totalorder %s104, %s105
    %p119 = scmp.eq.s32.totalorder %s15, 1
    %p120 = por %p118, %p119
    %p122 = scmp.ne.s32.totalorder %s105, %s121
    %p123 = scmp.eq.s32.totalorder %s15, 0
    %p124 = por %p122, %p123
    %p125 = scmp.le.s32.totalorder 1, %s9
    %p126 = scmp.lt.s32.totalorder %s9, 3
    %p127 = pnand %p125, %p126
    %p128 = pneg %p127
    // Predicated region
    $region9: #{tpu_custom_call.1} parent=5 // pred_check
      _
    $region10: #{tpu_custom_call.1} parent=5 // pred_check_branch
      %130 = sbr.rel (%p127) target = $region12
    $region11: #{tpu_custom_call.1} parent=5 // pred_region
      %s131 = ssub.s32 %s9, 1
      // Predicated region
      $region13: #{tpu_custom_call.1} parent=11 // pred_check
        %p132 = pneg %p68
      $region14: #{tpu_custom_call.1} parent=11 // pred_check_branch
        %134 = sbr.rel (%p132) target = $region16
      $region15: #{tpu_custom_call.1} parent=11 // pred_region
        _
      $region16: #{tpu_custom_call.1} parent=11 // pred_fallthru
        _
      // Predicated region
      $region17: #{tpu_custom_call.1} parent=11 // pred_check
        %p135 = pneg %p89
      $region18: #{tpu_custom_call.1} parent=11 // pred_check_branch
        %137 = sbr.rel (%p135) target = $region20
      $region19: #{tpu_custom_call.1} parent=11 // pred_region
        _
      $region20: #{tpu_custom_call.1} parent=11 // pred_fallthru
        _
    $region12: #{tpu_custom_call.1} parent=5 // pred_fallthru
      _
    %p138 = scmp.lt.s32.totalorder %s9, 2
    // Predicated region
    $region21: #{tpu_custom_call.1} parent=5 // pred_check
      %p139 = pneg %p138
    $region22: #{tpu_custom_call.1} parent=5 // pred_check_branch
      %141 = sbr.rel (%p139) target = $region24
    $region23: #{tpu_custom_call.1} parent=5 // pred_region
      // Predicated region
      $region25: #{tpu_custom_call.1} parent=23 // pred_check
        %p142 = pneg %p41
      $region26: #{tpu_custom_call.1} parent=23 // pred_check_branch
        %144 = sbr.rel (%p142) target = $region28
      $region27: #{tpu_custom_call.1} parent=23 // pred_region
        %p145 = scmp.lt.s32.totalorder %s16, 1
        %s146 = scalar_select %p145, %s16, 1
        %s147 = smul.addr %s146, 34
        %s148 = smul.addr %s147, 4
        %s149 = scalar_lea.vmem %s0, %s148
      $region28: #{tpu_custom_call.1} parent=23 // pred_fallthru
        _
    $region24: #{tpu_custom_call.1} parent=5 // pred_fallthru
      _
    %p150 = scmp.le.s32.totalorder 1, %s9
    %p151 = scmp.lt.s32.totalorder %s9, 3
    %p152 = pnand %p150, %p151
    %p153 = pneg %p152
    // Predicated region
    $region29: #{tpu_custom_call.1} parent=5 // pred_check
      _
    $region30: #{tpu_custom_call.1} parent=5 // pred_check_branch
      %155 = sbr.rel (%p152) target = $region32
    $region31: #{tpu_custom_call.1} parent=5 // pred_region
      %s156 = ssub.s32 %s9, 1
      %p157 = scmp.lt.s32.totalorder %s18, 1
      %s158 = scalar_select %p157, %s18, 1
      %s159 = smul.addr %s158, 34
      %s160 = smul.addr %s159, 4
      %s161 = scalar_lea.vmem %s0, %s160
      %p162 = pneg %p47
      %p163 = pneg %p44
      %p164 = pneg %p68
      %p165 = pneg %p65
      %p166 = pneg %p89
      %p167 = pneg %p86
      %p168 = pneg %p117
      %p169 = pneg %p114
      %s170 = smul.u32 26, %s19
      %p171 = scmp.lt.s32.totalorder %s18, 1
      %s172 = scalar_select %p171, %s18, 1
      %p173 = scmp.lt.s32.totalorder %s170, 25
      %s174 = scalar_select %p173, %s170, 25
      %s175 = smul.addr %s172, 26
      %s176 = sadd.s32 %s174, %s175
      %s177 = smul.addr %s176, 4
      %s178 = scalar_lea.vmem %s3, %s177
      %p179 = scmp.lt.s32.totalorder %s18, 1
      %s180 = scalar_select %p179, %s18, 1
      %s181 = smul.addr %s180, 34
      %s182 = smul.addr %s181, 4
      %s183 = scalar_lea.vmem %s0, %s182
      %s184 = smul.u32 26, %s19
      %p185 = scmp.lt.s32.totalorder %s18, 1
      %s186 = scalar_select %p185, %s18, 1
      %p187 = scmp.lt.s32.totalorder %s184, 25
      %s188 = scalar_select %p187, %s184, 25
      %s189 = smul.addr %s186, 26
      %s190 = sadd.s32 %s188, %s189
      %s191 = smul.addr %s190, 4
      %s192 = scalar_lea.vmem %s3, %s191
      %s193 = smul.u32 26, %s19
      %s195 = smul.u32 %s19, 208
      %s196 = sshra.s32 %s195, 3
      %s197 = sand.u32 %s195, 7
      %s198 = smul.addr %s196, 4
      %s199 = scalar_lea.vmem %s183, %s198
      %v200 = vld [vmem:[%s199] sm:$0xf]
      %v201 = vld [vmem:[%s199 + $0x4] sm:$0xf]
      %v202 = vld [vmem:[%s199 + $0x8] sm:$0xf]
      %v203 = vld [vmem:[%s199 + $0xc] sm:$0xf]
      %v204 = vld [vmem:[%s199 + $0x10] sm:$0xf]
      %v205 = vld [vmem:[%s199 + $0x14] sm:$0xf]
      %v206 = vld [vmem:[%s199 + $0x18] sm:$0xf]
      %v207 = vld [vmem:[%s199 + $0x1c] sm:$0xf]
      %v208 = vld [vmem:[%s199 + $0x20] sm:$0xf]
      %v209 = vld [vmem:[%s199 + $0x24] sm:$0xf]
      %v210 = vld [vmem:[%s199 + $0x28] sm:$0xf]
      %v211 = vld [vmem:[%s199 + $0x2c] sm:$0xf]
      %v212 = vld [vmem:[%s199 + $0x30] sm:$0xf]
      %v213 = vld [vmem:[%s199 + $0x34] sm:$0xf]
      %v214 = vld [vmem:[%s199 + $0x38] sm:$0xf]
      %v215 = vld [vmem:[%s199 + $0x3c] sm:$0xf]
      %v216 = vld [vmem:[%s199 + $0x40] sm:$0xf]
      %v217 = vld [vmem:[%s199 + $0x44] sm:$0xf]
      %v218 = vld [vmem:[%s199 + $0x48] sm:$0xf]
      %v219 = vld [vmem:[%s199 + $0x4c] sm:$0xf]
      %v220 = vld [vmem:[%s199 + $0x50] sm:$0xf]
      %v221 = vld [vmem:[%s199 + $0x54] sm:$0xf]
      %v222 = vld [vmem:[%s199 + $0x58] sm:$0xf]
      %v223 = vld [vmem:[%s199 + $0x5c] sm:$0xf]
      %v224 = vld [vmem:[%s199 + $0x60] sm:$0xf]
      %v225 = vld [vmem:[%s199 + $0x64] sm:$0xf]
      %v226 = vld [vmem:[%s1] sm:$0xf]
      %v227 = vld [vmem:[%s199 + $0x68] sm:$0xf]
      %v228 = vld [vmem:[%s199 + $0x6c] sm:$0xf]
      %s229 = scalar_lea.vmem %s1, 4
      %v230 = vld [vmem:[%s229] sm:$0xf]
      %v258 = vunpack.c.l.b16 %v200
      %v259 = vunpack.c.l.b16 %v201
      %v260 = vunpack.c.l.b16 %v202
      %v261 = vunpack.c.l.b16 %v203
      %v262 = vunpack.c.l.b16 %v204
      %v263 = vunpack.c.l.b16 %v205
      %v264 = vunpack.c.l.b16 %v206
      %v265 = vunpack.c.l.b16 %v207
      %v266 = vunpack.c.l.b16 %v208
      %v267 = vunpack.c.l.b16 %v209
      %v268 = vunpack.c.l.b16 %v210
      %v269 = vunpack.c.l.b16 %v211
      %v270 = vunpack.c.l.b16 %v212
      %v271 = vunpack.c.l.b16 %v213
      %v272 = vunpack.c.l.b16 %v214
      %v273 = vunpack.c.l.b16 %v215
      %v274 = vunpack.c.l.b16 %v216
      %v275 = vunpack.c.l.b16 %v217
      %v276 = vunpack.c.l.b16 %v218
      %v277 = vunpack.c.l.b16 %v219
      %v278 = vunpack.c.l.b16 %v220
      %v279 = vunpack.c.l.b16 %v221
      %v280 = vunpack.c.l.b16 %v222
      %v281 = vunpack.c.l.b16 %v223
      %v282 = vunpack.c.l.b16 %v224
      %v283 = vunpack.c.l.b16 %v225
      %v284 = vunpack.c.l.b16 %v227
      %v285 = vpack.c.b16 %v259, %v258
      %v286 = vpack.c.b16 %v261, %v260
      %v287 = vpack.c.b16 %v263, %v262
      %v288 = vpack.c.b16 %v265, %v264
      %v289 = vpack.c.b16 %v267, %v266
      %v290 = vpack.c.b16 %v269, %v268
      %v291 = vpack.c.b16 %v271, %v270
      %v292 = vpack.c.b16 %v273, %v272
      %v293 = vpack.c.b16 %v275, %v274
      %v294 = vpack.c.b16 %v277, %v276
      %v295 = vpack.c.b16 %v279, %v278
      %v296 = vpack.c.b16 %v281, %v280
      %v297 = vpack.c.b16 %v283, %v282
      %v298 = vpack.c.b16 %v284, %v284
      %vm299 = vsmask.f32 7424
      %v301 = vshrl.u32 %v285, 16
      %v303 = vshll.u32 %v285, 16
      %v305 = vrot.slane %v303, 1
      %v306 = vor.u32 %v301, %v305
      %v308 = vshll.u32 %v286, 16
      %v310 = vrot.slane %v308, 1
      %v311 = vsel %vm299, %v306, %v310
      %v312 = vshrl.u32 %v286, 16
      %v314 = vor.u32 %v312, %v310
      %v316 = vshll.u32 %v287, 16
      %v318 = vrot.slane %v316, 1
      %v319 = vsel %vm299, %v314, %v318
      %v320 = vshrl.u32 %v287, 16
      %v322 = vor.u32 %v320, %v318
      %v324 = vshll.u32 %v288, 16
      %v326 = vrot.slane %v324, 1
      %v327 = vsel %vm299, %v322, %v326
      %v328 = vshrl.u32 %v288, 16
      %v330 = vor.u32 %v328, %v326
      %v332 = vshll.u32 %v289, 16
      %v334 = vrot.slane %v332, 1
      %v335 = vsel %vm299, %v330, %v334
      %v336 = vshrl.u32 %v289, 16
      %v338 = vor.u32 %v336, %v334
      %v340 = vshll.u32 %v290, 16
      %v342 = vrot.slane %v340, 1
      %v343 = vsel %vm299, %v338, %v342
      %v344 = vshrl.u32 %v290, 16
      %v346 = vor.u32 %v344, %v342
      %v348 = vshll.u32 %v291, 16
      %v350 = vrot.slane %v348, 1
      %v351 = vsel %vm299, %v346, %v350
      %v352 = vshrl.u32 %v291, 16
      %v354 = vor.u32 %v352, %v350
      %v356 = vshll.u32 %v292, 16
      %v358 = vrot.slane %v356, 1
      %v359 = vsel %vm299, %v354, %v358
      %v360 = vshrl.u32 %v292, 16
      %v362 = vor.u32 %v360, %v358
      %v364 = vshll.u32 %v293, 16
      %v366 = vrot.slane %v364, 1
      %v367 = vsel %vm299, %v362, %v366
      %v368 = vshrl.u32 %v293, 16
      %v370 = vor.u32 %v368, %v366
      %v372 = vshll.u32 %v294, 16
      %v374 = vrot.slane %v372, 1
      %v375 = vsel %vm299, %v370, %v374
      %v376 = vshrl.u32 %v294, 16
      %v378 = vor.u32 %v376, %v374
      %v380 = vshll.u32 %v295, 16
      %v382 = vrot.slane %v380, 1
      %v383 = vsel %vm299, %v378, %v382
      %v384 = vshrl.u32 %v295, 16
      %v386 = vor.u32 %v384, %v382
      %v388 = vshll.u32 %v296, 16
      %v390 = vrot.slane %v388, 1
      %v391 = vsel %vm299, %v386, %v390
      %v392 = vshrl.u32 %v296, 16
      %v394 = vor.u32 %v392, %v390
      %v396 = vshll.u32 %v297, 16
      %v398 = vrot.slane %v396, 1
      %v399 = vsel %vm299, %v394, %v398
      %v400 = vshrl.u32 %v297, 16
      %v402 = vor.u32 %v400, %v398
      %v404 = vshll.u32 %v298, 16
      %v406 = vrot.slane %v404, 1
      %v407 = vsel %vm299, %v402, %v406
      %vm408 = vcmask 64512
      %v410 = vsel %vm408, %v311, 0
      %v413 = vsel %vm408, %v319, 0
      %v416 = vsel %vm408, %v327, 0
      %v419 = vsel %vm408, %v335, 0
      %v422 = vsel %vm408, %v343, 0
      %v425 = vsel %vm408, %v351, 0
      %v428 = vsel %vm408, %v359, 0
      %v431 = vsel %vm408, %v367, 0
      %v434 = vsel %vm408, %v375, 0
      %v437 = vsel %vm408, %v383, 0
      %v440 = vsel %vm408, %v391, 0
      %v443 = vsel %vm408, %v399, 0
      %v446 = vsel %vm408, %v407, 0
      %vm448 = vcmask 1043456
      %v450 = vsel %vm448, %v230, 0
      %452 = vmatpush.bf16.msra.mxu0 0
      %453 = vmatpush.bf16.msra.mxu0 0
      %454 = vmatpush.bf16.msra.mxu0 0
      %455 = vmatpush.bf16.msra.mxu0 0
      %456 = vmatpush.bf16.msra.mxu0 0
      %457 = vmatpush.bf16.msra.mxu0 0
      %458 = vmatpush.bf16.msra.mxu0 0
      %459 = vmatpush.bf16.msra.mxu0 %v450
      %460 = vmatmul.bf16.gmra.mxu0 %v410
      %v461 = vpop.f32.mrf.mxu0
      %v462 = vadd.f32 0.0, %v461
      %v463 = vpop.f32.mrf.mxu0
      %v464 = vadd.f32 0.0, %v463
      %465 = vmatmul.bf16.gmra.mxu0 %v413
      %v466 = vpop.f32.mrf.mxu0
      %v467 = vadd.f32 0.0, %v466
      %v468 = vpop.f32.mrf.mxu0
      %v469 = vadd.f32 0.0, %v468
      %470 = vmatmul.bf16.gmra.mxu0 %v416
      %v471 = vpop.f32.mrf.mxu0
      %v472 = vadd.f32 0.0, %v471
      %v473 = vpop.f32.mrf.mxu0
      %v474 = vadd.f32 0.0, %v473
      %475 = vmatmul.bf16.gmra.mxu0 %v419
      %v476 = vpop.f32.mrf.mxu0
      %v477 = vadd.f32 0.0, %v476
      %v478 = vpop.f32.mrf.mxu0
      %v479 = vadd.f32 0.0, %v478
      %480 = vmatmul.bf16.gmra.mxu0 %v422
      %v481 = vpop.f32.mrf.mxu0
      %v482 = vadd.f32 0.0, %v481
      %v483 = vpop.f32.mrf.mxu0
      %v484 = vadd.f32 0.0, %v483
      %485 = vmatmul.bf16.gmra.mxu0 %v425
      %v486 = vpop.f32.mrf.mxu0
      %v487 = vadd.f32 0.0, %v486
      %v488 = vpop.f32.mrf.mxu0
      %v489 = vadd.f32 0.0, %v488
      %490 = vmatmul.bf16.gmra.mxu0 %v428
      %v491 = vpop.f32.mrf.mxu0
      %v492 = vadd.f32 0.0, %v491
      %v493 = vpop.f32.mrf.mxu0
      %v494 = vadd.f32 0.0, %v493
      %495 = vmatmul.bf16.gmra.mxu0 %v431
      %v496 = vpop.f32.mrf.mxu0
      %v497 = vadd.f32 0.0, %v496
      %v498 = vpop.f32.mrf.mxu0
      %v499 = vadd.f32 0.0, %v498
      %500 = vmatmul.bf16.gmra.mxu0 %v434
      %v501 = vpop.f32.mrf.mxu0
      %v502 = vadd.f32 0.0, %v501
      %v503 = vpop.f32.mrf.mxu0
      %v504 = vadd.f32 0.0, %v503
      %505 = vmatmul.bf16.gmra.mxu0 %v437
      %v506 = vpop.f32.mrf.mxu0
      %v507 = vadd.f32 0.0, %v506
      %v508 = vpop.f32.mrf.mxu0
      %v509 = vadd.f32 0.0, %v508
      %510 = vmatmul.bf16.gmra.mxu0 %v440
      %v511 = vpop.f32.mrf.mxu0
      %v512 = vadd.f32 0.0, %v511
      %v513 = vpop.f32.mrf.mxu0
      %v514 = vadd.f32 0.0, %v513
      %515 = vmatmul.bf16.gmra.mxu0 %v443
      %v516 = vpop.f32.mrf.mxu0
      %v517 = vadd.f32 0.0, %v516
      %v518 = vpop.f32.mrf.mxu0
      %v519 = vadd.f32 0.0, %v518
      %520 = vmatmul.bf16.gmra.mxu0 %v446
      %v521 = vpop.f32.mrf.mxu0
      %v522 = vadd.f32 0.0, %v521
      %v523 = vpop.f32.mrf.mxu0
      %v524 = vadd.f32 0.0, %v523
      %525 = vdwg.mxu0
      %v526 = vsel %vm408, %v285, 0
      %v528 = vsel %vm408, %v286, 0
      %v530 = vsel %vm408, %v287, 0
      %v532 = vsel %vm408, %v288, 0
      %v534 = vsel %vm408, %v289, 0
      %v536 = vsel %vm408, %v290, 0
      %v538 = vsel %vm408, %v291, 0
      %v540 = vsel %vm408, %v292, 0
      %v542 = vsel %vm408, %v293, 0
      %v544 = vsel %vm408, %v294, 0
      %v546 = vsel %vm408, %v295, 0
      %v548 = vsel %vm408, %v296, 0
      %v550 = vsel %vm408, %v297, 0
      %v553 = vsel %vm448, %v226, 0
      %555 = vmatpush.bf16.msra.mxu0 0
      %556 = vmatpush.bf16.msra.mxu0 0
      %557 = vmatpush.bf16.msra.mxu0 0
      %558 = vmatpush.bf16.msra.mxu0 0
      %559 = vmatpush.bf16.msra.mxu0 0
      %560 = vmatpush.bf16.msra.mxu0 0
      %561 = vmatpush.bf16.msra.mxu0 0
      %562 = vmatpush.bf16.msra.mxu0 %v553
      %563 = vmatmul.bf16.gmra.mxu0 %v526
      %v564 = vpop.f32.mrf.mxu0
      %v565 = vadd.f32 %v462, %v564
      %v566 = vpop.f32.mrf.mxu0
      %v567 = vadd.f32 %v464, %v566
      %568 = vmatmul.bf16.gmra.mxu0 %v528
      %v569 = vpop.f32.mrf.mxu0
      %v570 = vadd.f32 %v467, %v569
      %v571 = vpop.f32.mrf.mxu0
      %v572 = vadd.f32 %v469, %v571
      %573 = vmatmul.bf16.gmra.mxu0 %v530
      %v574 = vpop.f32.mrf.mxu0
      %v575 = vadd.f32 %v472, %v574
      %v576 = vpop.f32.mrf.mxu0
      %v577 = vadd.f32 %v474, %v576
      %578 = vmatmul.bf16.gmra.mxu0 %v532
      %v579 = vpop.f32.mrf.mxu0
      %v580 = vadd.f32 %v477, %v579
      %v581 = vpop.f32.mrf.mxu0
      %v582 = vadd.f32 %v479, %v581
      %583 = vmatmul.bf16.gmra.mxu0 %v534
      %v584 = vpop.f32.mrf.mxu0
      %v585 = vadd.f32 %v482, %v584
      %v586 = vpop.f32.mrf.mxu0
      %v587 = vadd.f32 %v484, %v586
      %588 = vmatmul.bf16.gmra.mxu0 %v536
      %v589 = vpop.f32.mrf.mxu0
      %v590 = vadd.f32 %v487, %v589
      %v591 = vpop.f32.mrf.mxu0
      %v592 = vadd.f32 %v489, %v591
      %593 = vmatmul.bf16.gmra.mxu0 %v538
      %v594 = vpop.f32.mrf.mxu0
      %v595 = vadd.f32 %v492, %v594
      %v596 = vpop.f32.mrf.mxu0
      %v597 = vadd.f32 %v494, %v596
      %598 = vmatmul.bf16.gmra.mxu0 %v540
      %v599 = vpop.f32.mrf.mxu0
      %v600 = vadd.f32 %v497, %v599
      %v601 = vpop.f32.mrf.mxu0
      %v602 = vadd.f32 %v499, %v601
      %603 = vmatmul.bf16.gmra.mxu0 %v542
      %v604 = vpop.f32.mrf.mxu0
      %v605 = vadd.f32 %v502, %v604
      %v606 = vpop.f32.mrf.mxu0
      %v607 = vadd.f32 %v504, %v606
      %608 = vmatmul.bf16.gmra.mxu0 %v544
      %v609 = vpop.f32.mrf.mxu0
      %v610 = vadd.f32 %v507, %v609
      %v611 = vpop.f32.mrf.mxu0
      %v612 = vadd.f32 %v509, %v611
      %613 = vmatmul.bf16.gmra.mxu0 %v546
      %v614 = vpop.f32.mrf.mxu0
      %v615 = vadd.f32 %v512, %v614
      %v616 = vpop.f32.mrf.mxu0
      %v617 = vadd.f32 %v514, %v616
      %618 = vmatmul.bf16.gmra.mxu0 %v548
      %v619 = vpop.f32.mrf.mxu0
      %v620 = vadd.f32 %v517, %v619
      %v621 = vpop.f32.mrf.mxu0
      %v622 = vadd.f32 %v519, %v621
      %623 = vmatmul.bf16.gmra.mxu0 %v550
      %v624 = vpop.f32.mrf.mxu0
      %v625 = vadd.f32 %v522, %v624
      %v626 = vpop.f32.mrf.mxu0
      %v627 = vadd.f32 %v524, %v626
      %628 = vdwg.mxu0
      %s629 = scalar_lea.vmem %s1, 8
      %v630 = vld [vmem:[%s629] sm:$0xf]
      %vm631 = vcmask 1046528
      %v632 = vrot.slane %v285, 1
      %v633 = vrot.slane %v286, 1
      %v634 = vsel %vm631, %v632, %v633
      %v635 = vrot.slane %v287, 1
      %v636 = vsel %vm631, %v633, %v635
      %v637 = vrot.slane %v288, 1
      %v638 = vsel %vm631, %v635, %v637
      %v639 = vrot.slane %v289, 1
      %v640 = vsel %vm631, %v637, %v639
      %v641 = vrot.slane %v290, 1
      %v642 = vsel %vm631, %v639, %v641
      %v643 = vrot.slane %v291, 1
      %v644 = vsel %vm631, %v641, %v643
      %v645 = vrot.slane %v292, 1
      %v646 = vsel %vm631, %v643, %v645
      %v647 = vrot.slane %v293, 1
      %v648 = vsel %vm631, %v645, %v647
      %v649 = vrot.slane %v294, 1
      %v650 = vsel %vm631, %v647, %v649
      %v651 = vrot.slane %v295, 1
      %v652 = vsel %vm631, %v649, %v651
      %v653 = vrot.slane %v296, 1
      %v654 = vsel %vm631, %v651, %v653
      %v655 = vrot.slane %v297, 1
      %v656 = vsel %vm631, %v653, %v655
      %v657 = vrot.slane %v298, 1
      %v658 = vsel %vm631, %v655, %v657
      %v660 = vsel %vm408, %v634, 0
      %v663 = vsel %vm408, %v636, 0
      %v666 = vsel %vm408, %v638, 0
      %v669 = vsel %vm408, %v640, 0
      %v672 = vsel %vm408, %v642, 0
      %v675 = vsel %vm408, %v644, 0
      %v678 = vsel %vm408, %v646, 0
      %v681 = vsel %vm408, %v648, 0
      %v684 = vsel %vm408, %v650, 0
      %v687 = vsel %vm408, %v652, 0
      %v690 = vsel %vm408, %v654, 0
      %v693 = vsel %vm408, %v656, 0
      %v696 = vsel %vm408, %v658, 0
      %v699 = vsel %vm448, %v630, 0
      %701 = vmatpush.bf16.msra.mxu0 0
      %702 = vmatpush.bf16.msra.mxu0 0
      %703 = vmatpush.bf16.msra.mxu0 0
      %704 = vmatpush.bf16.msra.mxu0 0
      %705 = vmatpush.bf16.msra.mxu0 0
      %706 = vmatpush.bf16.msra.mxu0 0
      %707 = vmatpush.bf16.msra.mxu0 0
      %708 = vmatpush.bf16.msra.mxu0 %v699
      %709 = vmatmul.bf16.gmra.mxu0 %v660
      %v710 = vpop.f32.mrf.mxu0
      %v711 = vadd.f32 0.0, %v710
      %v712 = vpop.f32.mrf.mxu0
      %v713 = vadd.f32 0.0, %v712
      %714 = vmatmul.bf16.gmra.mxu0 %v663
      %v715 = vpop.f32.mrf.mxu0
      %v716 = vadd.f32 0.0, %v715
      %v717 = vpop.f32.mrf.mxu0
      %v718 = vadd.f32 0.0, %v717
      %719 = vmatmul.bf16.gmra.mxu0 %v666
      %v720 = vpop.f32.mrf.mxu0
      %v721 = vadd.f32 0.0, %v720
      %v722 = vpop.f32.mrf.mxu0
      %v723 = vadd.f32 0.0, %v722
      %724 = vmatmul.bf16.gmra.mxu0 %v669
      %v725 = vpop.f32.mrf.mxu0
      %v726 = vadd.f32 0.0, %v725
      %v727 = vpop.f32.mrf.mxu0
      %v728 = vadd.f32 0.0, %v727
      %729 = vmatmul.bf16.gmra.mxu0 %v672
      %v730 = vpop.f32.mrf.mxu0
      %v731 = vadd.f32 0.0, %v730
      %v732 = vpop.f32.mrf.mxu0
      %v733 = vadd.f32 0.0, %v732
      %734 = vmatmul.bf16.gmra.mxu0 %v675
      %v735 = vpop.f32.mrf.mxu0
      %v736 = vadd.f32 0.0, %v735
      %v737 = vpop.f32.mrf.mxu0
      %v738 = vadd.f32 0.0, %v737
      %739 = vmatmul.bf16.gmra.mxu0 %v678
      %v740 = vpop.f32.mrf.mxu0
      %v741 = vadd.f32 0.0, %v740
      %v742 = vpop.f32.mrf.mxu0
      %v743 = vadd.f32 0.0, %v742
      %744 = vmatmul.bf16.gmra.mxu0 %v681
      %v745 = vpop.f32.mrf.mxu0
      %v746 = vadd.f32 0.0, %v745
      %v747 = vpop.f32.mrf.mxu0
      %v748 = vadd.f32 0.0, %v747
      %749 = vmatmul.bf16.gmra.mxu0 %v684
      %v750 = vpop.f32.mrf.mxu0
      %v751 = vadd.f32 0.0, %v750
      %v752 = vpop.f32.mrf.mxu0
      %v753 = vadd.f32 0.0, %v752
      %754 = vmatmul.bf16.gmra.mxu0 %v687
      %v755 = vpop.f32.mrf.mxu0
      %v756 = vadd.f32 0.0, %v755
      %v757 = vpop.f32.mrf.mxu0
      %v758 = vadd.f32 0.0, %v757
      %759 = vmatmul.bf16.gmra.mxu0 %v690
      %v760 = vpop.f32.mrf.mxu0
      %v761 = vadd.f32 0.0, %v760
      %v762 = vpop.f32.mrf.mxu0
      %v763 = vadd.f32 0.0, %v762
      %764 = vmatmul.bf16.gmra.mxu0 %v693
      %v765 = vpop.f32.mrf.mxu0
      %v766 = vadd.f32 0.0, %v765
      %v767 = vpop.f32.mrf.mxu0
      %v768 = vadd.f32 0.0, %v767
      %769 = vmatmul.bf16.gmra.mxu0 %v696
      %v770 = vpop.f32.mrf.mxu0
      %v771 = vadd.f32 0.0, %v770
      %v772 = vpop.f32.mrf.mxu0
      %v773 = vadd.f32 0.0, %v772
      %774 = vdwg.mxu0
      %v775 = vadd.f32 %v565, %v711
      %v776 = vadd.f32 %v567, %v713
      %v777 = vadd.f32 %v570, %v716
      %v778 = vadd.f32 %v572, %v718
      %v779 = vadd.f32 %v575, %v721
      %v780 = vadd.f32 %v577, %v723
      %v781 = vadd.f32 %v580, %v726
      %v782 = vadd.f32 %v582, %v728
      %v783 = vadd.f32 %v585, %v731
      %v784 = vadd.f32 %v587, %v733
      %v785 = vadd.f32 %v590, %v736
      %v786 = vadd.f32 %v592, %v738
      %v787 = vadd.f32 %v595, %v741
      %v788 = vadd.f32 %v597, %v743
      %v789 = vadd.f32 %v600, %v746
      %v790 = vadd.f32 %v602, %v748
      %v791 = vadd.f32 %v605, %v751
      %v792 = vadd.f32 %v607, %v753
      %v793 = vadd.f32 %v610, %v756
      %v794 = vadd.f32 %v612, %v758
      %v795 = vadd.f32 %v615, %v761
      %v796 = vadd.f32 %v617, %v763
      %v797 = vadd.f32 %v620, %v766
      %v798 = vadd.f32 %v622, %v768
      %v799 = vadd.f32 %v625, %v771
      %v800 = vadd.f32 %v627, %v773
      %s801 = scalar_lea.vmem %s1, 12
      %v802 = vld [vmem:[%s801] sm:$0xf]
      %v804 = vunpack.c.l.b16 %v228
      %v805 = vpack.c.b16 %v260, %v259
      %v806 = vpack.c.b16 %v262, %v261
      %v807 = vpack.c.b16 %v264, %v263
      %v808 = vpack.c.b16 %v266, %v265
      %v809 = vpack.c.b16 %v268, %v267
      %v810 = vpack.c.b16 %v270, %v269
      %v811 = vpack.c.b16 %v272, %v271
      %v812 = vpack.c.b16 %v274, %v273
      %v813 = vpack.c.b16 %v276, %v275
      %v814 = vpack.c.b16 %v278, %v277
      %v815 = vpack.c.b16 %v280, %v279
      %v816 = vpack.c.b16 %v282, %v281
      %v817 = vpack.c.b16 %v284, %v283
      %v818 = vpack.c.b16 %v804, %v804
      %vm819 = vcmask 1044480
      %v820 = vrot.slane %v805, 3
      %v821 = vrot.slane %v806, 3
      %v822 = vsel %vm819, %v820, %v821
      %v823 = vrot.slane %v807, 3
      %v824 = vsel %vm819, %v821, %v823
      %v825 = vrot.slane %v808, 3
      %v826 = vsel %vm819, %v823, %v825
      %v827 = vrot.slane %v809, 3
      %v828 = vsel %vm819, %v825, %v827
      %v829 = vrot.slane %v810, 3
      %v830 = vsel %vm819, %v827, %v829
      %v831 = vrot.slane %v811, 3
      %v832 = vsel %vm819, %v829, %v831
      %v833 = vrot.slane %v812, 3
      %v834 = vsel %vm819, %v831, %v833
      %v835 = vrot.slane %v813, 3
      %v836 = vsel %vm819, %v833, %v835
      %v837 = vrot.slane %v814, 3
      %v838 = vsel %vm819, %v835, %v837
      %v839 = vrot.slane %v815, 3
      %v840 = vsel %vm819, %v837, %v839
      %v841 = vrot.slane %v816, 3
      %v842 = vsel %vm819, %v839, %v841
      %v843 = vrot.slane %v817, 3
      %v844 = vsel %vm819, %v841, %v843
      %v845 = vrot.slane %v818, 3
      %v846 = vsel %vm819, %v843, %v845
      %v848 = vsel %vm408, %v822, 0
      %v851 = vsel %vm408, %v824, 0
      %v854 = vsel %vm408, %v826, 0
      %v857 = vsel %vm408, %v828, 0
      %v860 = vsel %vm408, %v830, 0
      %v863 = vsel %vm408, %v832, 0
      %v866 = vsel %vm408, %v834, 0
      %v869 = vsel %vm408, %v836, 0
      %v872 = vsel %vm408, %v838, 0
      %v875 = vsel %vm408, %v840, 0
      %v878 = vsel %vm408, %v842, 0
      %v881 = vsel %vm408, %v844, 0
      %v884 = vsel %vm408, %v846, 0
      %v887 = vsel %vm448, %v802, 0
      %889 = vmatpush.bf16.msra.mxu0 0
      %890 = vmatpush.bf16.msra.mxu0 0
      %891 = vmatpush.bf16.msra.mxu0 0
      %892 = vmatpush.bf16.msra.mxu0 0
      %893 = vmatpush.bf16.msra.mxu0 0
      %894 = vmatpush.bf16.msra.mxu0 0
      %895 = vmatpush.bf16.msra.mxu0 0
      %896 = vmatpush.bf16.msra.mxu0 %v887
      %897 = vmatmul.bf16.gmra.mxu0 %v848
      %v898 = vpop.f32.mrf.mxu0
      %v899 = vadd.f32 0.0, %v898
      %v900 = vpop.f32.mrf.mxu0
      %v901 = vadd.f32 0.0, %v900
      %902 = vmatmul.bf16.gmra.mxu0 %v851
      %v903 = vpop.f32.mrf.mxu0
      %v904 = vadd.f32 0.0, %v903
      %v905 = vpop.f32.mrf.mxu0
      %v906 = vadd.f32 0.0, %v905
      %907 = vmatmul.bf16.gmra.mxu0 %v854
      %v908 = vpop.f32.mrf.mxu0
      %v909 = vadd.f32 0.0, %v908
      %v910 = vpop.f32.mrf.mxu0
      %v911 = vadd.f32 0.0, %v910
      %912 = vmatmul.bf16.gmra.mxu0 %v857
      %v913 = vpop.f32.mrf.mxu0
      %v914 = vadd.f32 0.0, %v913
      %v915 = vpop.f32.mrf.mxu0
      %v916 = vadd.f32 0.0, %v915
      %917 = vmatmul.bf16.gmra.mxu0 %v860
      %v918 = vpop.f32.mrf.mxu0
      %v919 = vadd.f32 0.0, %v918
      %v920 = vpop.f32.mrf.mxu0
      %v921 = vadd.f32 0.0, %v920
      %922 = vmatmul.bf16.gmra.mxu0 %v863
      %v923 = vpop.f32.mrf.mxu0
      %v924 = vadd.f32 0.0, %v923
      %v925 = vpop.f32.mrf.mxu0
      %v926 = vadd.f32 0.0, %v925
      %927 = vmatmul.bf16.gmra.mxu0 %v866
      %v928 = vpop.f32.mrf.mxu0
      %v929 = vadd.f32 0.0, %v928
      %v930 = vpop.f32.mrf.mxu0
      %v931 = vadd.f32 0.0, %v930
      %932 = vmatmul.bf16.gmra.mxu0 %v869
      %v933 = vpop.f32.mrf.mxu0
      %v934 = vadd.f32 0.0, %v933
      %v935 = vpop.f32.mrf.mxu0
      %v936 = vadd.f32 0.0, %v935
      %937 = vmatmul.bf16.gmra.mxu0 %v872
      %v938 = vpop.f32.mrf.mxu0
      %v939 = vadd.f32 0.0, %v938
      %v940 = vpop.f32.mrf.mxu0
      %v941 = vadd.f32 0.0, %v940
      %942 = vmatmul.bf16.gmra.mxu0 %v875
      %v943 = vpop.f32.mrf.mxu0
      %v944 = vadd.f32 0.0, %v943
      %v945 = vpop.f32.mrf.mxu0
      %v946 = vadd.f32 0.0, %v945
      %947 = vmatmul.bf16.gmra.mxu0 %v878
      %v948 = vpop.f32.mrf.mxu0
      %v949 = vadd.f32 0.0, %v948
      %v950 = vpop.f32.mrf.mxu0
      %v951 = vadd.f32 0.0, %v950
      %952 = vmatmul.bf16.gmra.mxu0 %v881
      %v953 = vpop.f32.mrf.mxu0
      %v954 = vadd.f32 0.0, %v953
      %v955 = vpop.f32.mrf.mxu0
      %v956 = vadd.f32 0.0, %v955
      %957 = vmatmul.bf16.gmra.mxu0 %v884
      %v958 = vpop.f32.mrf.mxu0
      %v959 = vadd.f32 0.0, %v958
      %v960 = vpop.f32.mrf.mxu0
      %v961 = vadd.f32 0.0, %v960
      %962 = vdwg.mxu0
      %v963 = vadd.f32 %v775, %v899
      %v964 = vadd.f32 %v776, %v901
      %v965 = vadd.f32 %v777, %v904
      %v966 = vadd.f32 %v778, %v906
      %v967 = vadd.f32 %v779, %v909
      %v968 = vadd.f32 %v780, %v911
      %v969 = vadd.f32 %v781, %v914
      %v970 = vadd.f32 %v782, %v916
      %v971 = vadd.f32 %v783, %v919
      %v972 = vadd.f32 %v784, %v921
      %v973 = vadd.f32 %v785, %v924
      %v974 = vadd.f32 %v786, %v926
      %v975 = vadd.f32 %v787, %v929
      %v976 = vadd.f32 %v788, %v931
      %v977 = vadd.f32 %v789, %v934
      %v978 = vadd.f32 %v790, %v936
      %v979 = vadd.f32 %v791, %v939
      %v980 = vadd.f32 %v792, %v941
      %v981 = vadd.f32 %v793, %v944
      %v982 = vadd.f32 %v794, %v946
      %v983 = vadd.f32 %v795, %v949
      %v984 = vadd.f32 %v796, %v951
      %v985 = vadd.f32 %v797, %v954
      %v986 = vadd.f32 %v798, %v956
      %v987 = vadd.f32 %v799, %v959
      %v988 = vadd.f32 %v800, %v961
      %s989 = scalar_lea.vmem %s1, 16
      %v990 = vld [vmem:[%s989] sm:$0xf]
      %vm991 = vsmask.f32 4352
      %v993 = vshrl.u32 %v805, 16
      %v995 = vrot.slane %v993, 3
      %v996 = vshll.u32 %v805, 16
      %v998 = vrot.slane %v996, 4
      %v999 = vor.u32 %v995, %v998
      %v1001 = vshrl.u32 %v806, 16
      %v1003 = vrot.slane %v1001, 3
      %v1004 = vshll.u32 %v806, 16
      %v1006 = vrot.slane %v1004, 4
      %v1007 = vor.u32 %v1003, %v1006
      %v1008 = vsel %vm991, %v999, %v1007
      %v1010 = vshrl.u32 %v807, 16
      %v1012 = vrot.slane %v1010, 3
      %v1013 = vshll.u32 %v807, 16
      %v1015 = vrot.slane %v1013, 4
      %v1016 = vor.u32 %v1012, %v1015
      %v1017 = vsel %vm991, %v1007, %v1016
      %v1019 = vshrl.u32 %v808, 16
      %v1021 = vrot.slane %v1019, 3
      %v1022 = vshll.u32 %v808, 16
      %v1024 = vrot.slane %v1022, 4
      %v1025 = vor.u32 %v1021, %v1024
      %v1026 = vsel %vm991, %v1016, %v1025
      %v1028 = vshrl.u32 %v809, 16
      %v1030 = vrot.slane %v1028, 3
      %v1031 = vshll.u32 %v809, 16
      %v1033 = vrot.slane %v1031, 4
      %v1034 = vor.u32 %v1030, %v1033
      %v1035 = vsel %vm991, %v1025, %v1034
      %v1037 = vshrl.u32 %v810, 16
      %v1039 = vrot.slane %v1037, 3
      %v1040 = vshll.u32 %v810, 16
      %v1042 = vrot.slane %v1040, 4
      %v1043 = vor.u32 %v1039, %v1042
      %v1044 = vsel %vm991, %v1034, %v1043
      %v1046 = vshrl.u32 %v811, 16
      %v1048 = vrot.slane %v1046, 3
      %v1049 = vshll.u32 %v811, 16
      %v1051 = vrot.slane %v1049, 4
      %v1052 = vor.u32 %v1048, %v1051
      %v1053 = vsel %vm991, %v1043, %v1052
      %v1055 = vshrl.u32 %v812, 16
      %v1057 = vrot.slane %v1055, 3
      %v1058 = vshll.u32 %v812, 16
      %v1060 = vrot.slane %v1058, 4
      %v1061 = vor.u32 %v1057, %v1060
      %v1062 = vsel %vm991, %v1052, %v1061
      %v1064 = vshrl.u32 %v813, 16
      %v1066 = vrot.slane %v1064, 3
      %v1067 = vshll.u32 %v813, 16
      %v1069 = vrot.slane %v1067, 4
      %v1070 = vor.u32 %v1066, %v1069
      %v1071 = vsel %vm991, %v1061, %v1070
      %v1073 = vshrl.u32 %v814, 16
      %v1075 = vrot.slane %v1073, 3
      %v1076 = vshll.u32 %v814, 16
      %v1078 = vrot.slane %v1076, 4
      %v1079 = vor.u32 %v1075, %v1078
      %v1080 = vsel %vm991, %v1070, %v1079
      %v1082 = vshrl.u32 %v815, 16
      %v1084 = vrot.slane %v1082, 3
      %v1085 = vshll.u32 %v815, 16
      %v1087 = vrot.slane %v1085, 4
      %v1088 = vor.u32 %v1084, %v1087
      %v1089 = vsel %vm991, %v1079, %v1088
      %v1091 = vshrl.u32 %v816, 16
      %v1093 = vrot.slane %v1091, 3
      %v1094 = vshll.u32 %v816, 16
      %v1096 = vrot.slane %v1094, 4
      %v1097 = vor.u32 %v1093, %v1096
      %v1098 = vsel %vm991, %v1088, %v1097
      %v1100 = vshrl.u32 %v817, 16
      %v1102 = vrot.slane %v1100, 3
      %v1103 = vshll.u32 %v817, 16
      %v1105 = vrot.slane %v1103, 4
      %v1106 = vor.u32 %v1102, %v1105
      %v1107 = vsel %vm991, %v1097, %v1106
      %v1109 = vshrl.u32 %v818, 16
      %v1111 = vrot.slane %v1109, 3
      %v1112 = vshll.u32 %v818, 16
      %v1114 = vrot.slane %v1112, 4
      %v1115 = vor.u32 %v1111, %v1114
      %v1116 = vsel %vm991, %v1106, %v1115
      %v1118 = vsel %vm408, %v1008, 0
      %v1121 = vsel %vm408, %v1017, 0
      %v1124 = vsel %vm408, %v1026, 0
      %v1127 = vsel %vm408, %v1035, 0
      %v1130 = vsel %vm408, %v1044, 0
      %v1133 = vsel %vm408, %v1053, 0
      %v1136 = vsel %vm408, %v1062, 0
      %v1139 = vsel %vm408, %v1071, 0
      %v1142 = vsel %vm408, %v1080, 0
      %v1145 = vsel %vm408, %v1089, 0
      %v1148 = vsel %vm408, %v1098, 0
      %v1151 = vsel %vm408, %v1107, 0
      %v1154 = vsel %vm408, %v1116, 0
      %v1157 = vsel %vm448, %v990, 0
      %1159 = vmatpush.bf16.msra.mxu0 0
      %1160 = vmatpush.bf16.msra.mxu0 0
      %1161 = vmatpush.bf16.msra.mxu0 0
      %1162 = vmatpush.bf16.msra.mxu0 0
      %1163 = vmatpush.bf16.msra.mxu0 0
      %1164 = vmatpush.bf16.msra.mxu0 0
      %1165 = vmatpush.bf16.msra.mxu0 0
      %1166 = vmatpush.bf16.msra.mxu0 %v1157
      %1167 = vmatmul.bf16.gmra.mxu0 %v1118
      %v1168 = vpop.f32.mrf.mxu0
      %v1169 = vadd.f32 0.0, %v1168
      %v1170 = vpop.f32.mrf.mxu0
      %v1171 = vadd.f32 0.0, %v1170
      %1172 = vmatmul.bf16.gmra.mxu0 %v1121
      %v1173 = vpop.f32.mrf.mxu0
      %v1174 = vadd.f32 0.0, %v1173
      %v1175 = vpop.f32.mrf.mxu0
      %v1176 = vadd.f32 0.0, %v1175
      %1177 = vmatmul.bf16.gmra.mxu0 %v1124
      %v1178 = vpop.f32.mrf.mxu0
      %v1179 = vadd.f32 0.0, %v1178
      %v1180 = vpop.f32.mrf.mxu0
      %v1181 = vadd.f32 0.0, %v1180
      %1182 = vmatmul.bf16.gmra.mxu0 %v1127
      %v1183 = vpop.f32.mrf.mxu0
      %v1184 = vadd.f32 0.0, %v1183
      %v1185 = vpop.f32.mrf.mxu0
      %v1186 = vadd.f32 0.0, %v1185
      %1187 = vmatmul.bf16.gmra.mxu0 %v1130
      %v1188 = vpop.f32.mrf.mxu0
      %v1189 = vadd.f32 0.0, %v1188
      %v1190 = vpop.f32.mrf.mxu0
      %v1191 = vadd.f32 0.0, %v1190
      %1192 = vmatmul.bf16.gmra.mxu0 %v1133
      %v1193 = vpop.f32.mrf.mxu0
      %v1194 = vadd.f32 0.0, %v1193
      %v1195 = vpop.f32.mrf.mxu0
      %v1196 = vadd.f32 0.0, %v1195
      %1197 = vmatmul.bf16.gmra.mxu0 %v1136
      %v1198 = vpop.f32.mrf.mxu0
      %v1199 = vadd.f32 0.0, %v1198
      %v1200 = vpop.f32.mrf.mxu0
      %v1201 = vadd.f32 0.0, %v1200
      %1202 = vmatmul.bf16.gmra.mxu0 %v1139
      %v1203 = vpop.f32.mrf.mxu0
      %v1204 = vadd.f32 0.0, %v1203
      %v1205 = vpop.f32.mrf.mxu0
      %v1206 = vadd.f32 0.0, %v1205
      %1207 = vmatmul.bf16.gmra.mxu0 %v1142
      %v1208 = vpop.f32.mrf.mxu0
      %v1209 = vadd.f32 0.0, %v1208
      %v1210 = vpop.f32.mrf.mxu0
      %v1211 = vadd.f32 0.0, %v1210
      %1212 = vmatmul.bf16.gmra.mxu0 %v1145
      %v1213 = vpop.f32.mrf.mxu0
      %v1214 = vadd.f32 0.0, %v1213
      %v1215 = vpop.f32.mrf.mxu0
      %v1216 = vadd.f32 0.0, %v1215
      %1217 = vmatmul.bf16.gmra.mxu0 %v1148
      %v1218 = vpop.f32.mrf.mxu0
      %v1219 = vadd.f32 0.0, %v1218
      %v1220 = vpop.f32.mrf.mxu0
      %v1221 = vadd.f32 0.0, %v1220
      %1222 = vmatmul.bf16.gmra.mxu0 %v1151
      %v1223 = vpop.f32.mrf.mxu0
      %v1224 = vadd.f32 0.0, %v1223
      %v1225 = vpop.f32.mrf.mxu0
      %v1226 = vadd.f32 0.0, %v1225
      %1227 = vmatmul.bf16.gmra.mxu0 %v1154
      %v1228 = vpop.f32.mrf.mxu0
      %v1229 = vadd.f32 0.0, %v1228
      %v1230 = vpop.f32.mrf.mxu0
      %v1231 = vadd.f32 0.0, %v1230
      %1232 = vdwg.mxu0
      %v1233 = vadd.f32 %v963, %v1169
      %v1234 = vadd.f32 %v964, %v1171
      %v1235 = vadd.f32 %v965, %v1174
      %v1236 = vadd.f32 %v966, %v1176
      %v1237 = vadd.f32 %v967, %v1179
      %v1238 = vadd.f32 %v968, %v1181
      %v1239 = vadd.f32 %v969, %v1184
      %v1240 = vadd.f32 %v970, %v1186
      %v1241 = vadd.f32 %v971, %v1189
      %v1242 = vadd.f32 %v972, %v1191
      %v1243 = vadd.f32 %v973, %v1194
      %v1244 = vadd.f32 %v974, %v1196
      %v1245 = vadd.f32 %v975, %v1199
      %v1246 = vadd.f32 %v976, %v1201
      %v1247 = vadd.f32 %v977, %v1204
      %v1248 = vadd.f32 %v978, %v1206
      %v1249 = vadd.f32 %v979, %v1209
      %v1250 = vadd.f32 %v980, %v1211
      %v1251 = vadd.f32 %v981, %v1214
      %v1252 = vadd.f32 %v982, %v1216
      %v1253 = vadd.f32 %v983, %v1219
      %v1254 = vadd.f32 %v984, %v1221
      %v1255 = vadd.f32 %v985, %v1224
      %v1256 = vadd.f32 %v986, %v1226
      %v1257 = vadd.f32 %v987, %v1229
      %v1258 = vadd.f32 %v988, %v1231
      %s1259 = sadd.s32 %s195, 16
      %s1260 = sshra.s32 %s1259, 3
      %s1261 = sand.u32 %s1259, 7
      %s1262 = smul.addr %s1260, 4
      %s1263 = scalar_lea.vmem %s183, %s1262
      %v1264 = vld [vmem:[%s1263] sm:$0xf]
      %v1265 = vld [vmem:[%s1263 + $0x4] sm:$0xf]
      %v1266 = vld [vmem:[%s1263 + $0x8] sm:$0xf]
      %v1267 = vld [vmem:[%s1263 + $0xc] sm:$0xf]
      %v1268 = vld [vmem:[%s1263 + $0x10] sm:$0xf]
      %v1269 = vld [vmem:[%s1263 + $0x14] sm:$0xf]
      %v1270 = vld [vmem:[%s1263 + $0x18] sm:$0xf]
      %v1271 = vld [vmem:[%s1263 + $0x1c] sm:$0xf]
      %v1272 = vld [vmem:[%s1263 + $0x20] sm:$0xf]
      %v1273 = vld [vmem:[%s1263 + $0x24] sm:$0xf]
      %v1274 = vld [vmem:[%s1263 + $0x28] sm:$0xf]
      %v1275 = vld [vmem:[%s1263 + $0x2c] sm:$0xf]
      %v1276 = vld [vmem:[%s1263 + $0x30] sm:$0xf]
      %v1277 = vld [vmem:[%s1263 + $0x34] sm:$0xf]
      %v1278 = vld [vmem:[%s1263 + $0x38] sm:$0xf]
      %v1279 = vld [vmem:[%s1263 + $0x3c] sm:$0xf]
      %v1280 = vld [vmem:[%s1263 + $0x40] sm:$0xf]
      %v1281 = vld [vmem:[%s1263 + $0x44] sm:$0xf]
      %v1282 = vld [vmem:[%s1263 + $0x48] sm:$0xf]
      %v1283 = vld [vmem:[%s1263 + $0x4c] sm:$0xf]
      %v1284 = vld [vmem:[%s1263 + $0x50] sm:$0xf]
      %v1285 = vld [vmem:[%s1263 + $0x54] sm:$0xf]
      %v1286 = vld [vmem:[%s1263 + $0x58] sm:$0xf]
      %v1287 = vld [vmem:[%s1263 + $0x5c] sm:$0xf]
      %v1288 = vld [vmem:[%s1263 + $0x60] sm:$0xf]
      %v1289 = vld [vmem:[%s1263 + $0x64] sm:$0xf]
      %s1290 = scalar_lea.vmem %s1, 20
      %v1291 = vld [vmem:[%s1290] sm:$0xf]
      %v1318 = vunpack.c.l.b16 %v1264
      %v1319 = vunpack.c.l.b16 %v1265
      %v1320 = vunpack.c.l.b16 %v1266
      %v1321 = vunpack.c.l.b16 %v1267
      %v1322 = vunpack.c.l.b16 %v1268
      %v1323 = vunpack.c.l.b16 %v1269
      %v1324 = vunpack.c.l.b16 %v1270
      %v1325 = vunpack.c.l.b16 %v1271
      %v1326 = vunpack.c.l.b16 %v1272
      %v1327 = vunpack.c.l.b16 %v1273
      %v1328 = vunpack.c.l.b16 %v1274
      %v1329 = vunpack.c.l.b16 %v1275
      %v1330 = vunpack.c.l.b16 %v1276
      %v1331 = vunpack.c.l.b16 %v1277
      %v1332 = vunpack.c.l.b16 %v1278
      %v1333 = vunpack.c.l.b16 %v1279
      %v1334 = vunpack.c.l.b16 %v1280
      %v1335 = vunpack.c.l.b16 %v1281
      %v1336 = vunpack.c.l.b16 %v1282
      %v1337 = vunpack.c.l.b16 %v1283
      %v1338 = vunpack.c.l.b16 %v1284
      %v1339 = vunpack.c.l.b16 %v1285
      %v1340 = vunpack.c.l.b16 %v1286
      %v1341 = vunpack.c.l.b16 %v1287
      %v1342 = vunpack.c.l.b16 %v1288
      %v1343 = vunpack.c.l.b16 %v1289
      %v1344 = vpack.c.b16 %v1319, %v1318
      %v1345 = vpack.c.b16 %v1321, %v1320
      %v1346 = vpack.c.b16 %v1323, %v1322
      %v1347 = vpack.c.b16 %v1325, %v1324
      %v1348 = vpack.c.b16 %v1327, %v1326
      %v1349 = vpack.c.b16 %v1329, %v1328
      %v1350 = vpack.c.b16 %v1331, %v1330
      %v1351 = vpack.c.b16 %v1333, %v1332
      %v1352 = vpack.c.b16 %v1335, %v1334
      %v1353 = vpack.c.b16 %v1337, %v1336
      %v1354 = vpack.c.b16 %v1339, %v1338
      %v1355 = vpack.c.b16 %v1341, %v1340
      %v1356 = vpack.c.b16 %v1343, %v1342
      %v1358 = vsel %vm408, %v1344, 0
      %v1361 = vsel %vm408, %v1345, 0
      %v1364 = vsel %vm408, %v1346, 0
      %v1367 = vsel %vm408, %v1347, 0
      %v1370 = vsel %vm408, %v1348, 0
      %v1373 = vsel %vm408, %v1349, 0
      %v1376 = vsel %vm408, %v1350, 0
      %v1379 = vsel %vm408, %v1351, 0
      %v1382 = vsel %vm408, %v1352, 0
      %v1385 = vsel %vm408, %v1353, 0
      %v1388 = vsel %vm408, %v1354, 0
      %v1391 = vsel %vm408, %v1355, 0
      %v1394 = vsel %vm408, %v1356, 0
      %v1397 = vsel %vm448, %v1291, 0
      %1399 = vmatpush.bf16.msra.mxu0 0
      %1400 = vmatpush.bf16.msra.mxu0 0
      %1401 = vmatpush.bf16.msra.mxu0 0
      %1402 = vmatpush.bf16.msra.mxu0 0
      %1403 = vmatpush.bf16.msra.mxu0 0
      %1404 = vmatpush.bf16.msra.mxu0 0
      %1405 = vmatpush.bf16.msra.mxu0 0
      %1406 = vmatpush.bf16.msra.mxu0 %v1397
      %1407 = vmatmul.bf16.gmra.mxu0 %v1358
      %v1408 = vpop.f32.mrf.mxu0
      %v1409 = vadd.f32 0.0, %v1408
      %v1410 = vpop.f32.mrf.mxu0
      %v1411 = vadd.f32 0.0, %v1410
      %1412 = vmatmul.bf16.gmra.mxu0 %v1361
      %v1413 = vpop.f32.mrf.mxu0
      %v1414 = vadd.f32 0.0, %v1413
      %v1415 = vpop.f32.mrf.mxu0
      %v1416 = vadd.f32 0.0, %v1415
      %1417 = vmatmul.bf16.gmra.mxu0 %v1364
      %v1418 = vpop.f32.mrf.mxu0
      %v1419 = vadd.f32 0.0, %v1418
      %v1420 = vpop.f32.mrf.mxu0
      %v1421 = vadd.f32 0.0, %v1420
      %1422 = vmatmul.bf16.gmra.mxu0 %v1367
      %v1423 = vpop.f32.mrf.mxu0
      %v1424 = vadd.f32 0.0, %v1423
      %v1425 = vpop.f32.mrf.mxu0
      %v1426 = vadd.f32 0.0, %v1425
      %1427 = vmatmul.bf16.gmra.mxu0 %v1370
      %v1428 = vpop.f32.mrf.mxu0
      %v1429 = vadd.f32 0.0, %v1428
      %v1430 = vpop.f32.mrf.mxu0
      %v1431 = vadd.f32 0.0, %v1430
      %1432 = vmatmul.bf16.gmra.mxu0 %v1373
      %v1433 = vpop.f32.mrf.mxu0
      %v1434 = vadd.f32 0.0, %v1433
      %v1435 = vpop.f32.mrf.mxu0
      %v1436 = vadd.f32 0.0, %v1435
      %1437 = vmatmul.bf16.gmra.mxu0 %v1376
      %v1438 = vpop.f32.mrf.mxu0
      %v1439 = vadd.f32 0.0, %v1438
      %v1440 = vpop.f32.mrf.mxu0
      %v1441 = vadd.f32 0.0, %v1440
      %1442 = vmatmul.bf16.gmra.mxu0 %v1379
      %v1443 = vpop.f32.mrf.mxu0
      %v1444 = vadd.f32 0.0, %v1443
      %v1445 = vpop.f32.mrf.mxu0
      %v1446 = vadd.f32 0.0, %v1445
      %1447 = vmatmul.bf16.gmra.mxu0 %v1382
      %v1448 = vpop.f32.mrf.mxu0
      %v1449 = vadd.f32 0.0, %v1448
      %v1450 = vpop.f32.mrf.mxu0
      %v1451 = vadd.f32 0.0, %v1450
      %1452 = vmatmul.bf16.gmra.mxu0 %v1385
      %v1453 = vpop.f32.mrf.mxu0
      %v1454 = vadd.f32 0.0, %v1453
      %v1455 = vpop.f32.mrf.mxu0
      %v1456 = vadd.f32 0.0, %v1455
      %1457 = vmatmul.bf16.gmra.mxu0 %v1388
      %v1458 = vpop.f32.mrf.mxu0
      %v1459 = vadd.f32 0.0, %v1458
      %v1460 = vpop.f32.mrf.mxu0
      %v1461 = vadd.f32 0.0, %v1460
      %1462 = vmatmul.bf16.gmra.mxu0 %v1391
      %v1463 = vpop.f32.mrf.mxu0
      %v1464 = vadd.f32 0.0, %v1463
      %v1465 = vpop.f32.mrf.mxu0
      %v1466 = vadd.f32 0.0, %v1465
      %1467 = vmatmul.bf16.gmra.mxu0 %v1394
      %v1468 = vpop.f32.mrf.mxu0
      %v1469 = vadd.f32 0.0, %v1468
      %v1470 = vpop.f32.mrf.mxu0
      %v1471 = vadd.f32 0.0, %v1470
      %1472 = vdwg.mxu0
      %v1473 = vadd.f32 %v1233, %v1409
      %v1474 = vadd.f32 %v1234, %v1411
      %v1475 = vadd.f32 %v1235, %v1414
      %v1476 = vadd.f32 %v1236, %v1416
      %v1477 = vadd.f32 %v1237, %v1419
      %v1478 = vadd.f32 %v1238, %v1421
      %v1479 = vadd.f32 %v1239, %v1424
      %v1480 = vadd.f32 %v1240, %v1426
      %v1481 = vadd.f32 %v1241, %v1429
      %v1482 = vadd.f32 %v1242, %v1431
      %v1483 = vadd.f32 %v1243, %v1434
      %v1484 = vadd.f32 %v1244, %v1436
      %v1485 = vadd.f32 %v1245, %v1439
      %v1486 = vadd.f32 %v1246, %v1441
      %v1487 = vadd.f32 %v1247, %v1444
      %v1488 = vadd.f32 %v1248, %v1446
      %v1489 = vadd.f32 %v1249, %v1449
      %v1490 = vadd.f32 %v1250, %v1451
      %v1491 = vadd.f32 %v1251, %v1454
      %v1492 = vadd.f32 %v1252, %v1456
      %v1493 = vadd.f32 %v1253, %v1459
      %v1494 = vadd.f32 %v1254, %v1461
      %v1495 = vadd.f32 %v1255, %v1464
      %v1496 = vadd.f32 %v1256, %v1466
      %v1497 = vadd.f32 %v1257, %v1469
      %v1498 = vadd.f32 %v1258, %v1471
      %v1499 = vld [vmem:[%s1263 + $0x4] sm:$0xf]
      %v1500 = vld [vmem:[%s1263 + $0x8] sm:$0xf]
      %v1501 = vld [vmem:[%s1263 + $0xc] sm:$0xf]
      %v1502 = vld [vmem:[%s1263 + $0x10] sm:$0xf]
      %v1503 = vld [vmem:[%s1263 + $0x14] sm:$0xf]
      %v1504 = vld [vmem:[%s1263 + $0x18] sm:$0xf]
      %v1505 = vld [vmem:[%s1263 + $0x1c] sm:$0xf]
      %v1506 = vld [vmem:[%s1263 + $0x20] sm:$0xf]
      %v1507 = vld [vmem:[%s1263 + $0x24] sm:$0xf]
      %v1508 = vld [vmem:[%s1263 + $0x28] sm:$0xf]
      %v1509 = vld [vmem:[%s1263 + $0x2c] sm:$0xf]
      %v1510 = vld [vmem:[%s1263 + $0x30] sm:$0xf]
      %v1511 = vld [vmem:[%s1263 + $0x34] sm:$0xf]
      %v1512 = vld [vmem:[%s1263 + $0x38] sm:$0xf]
      %v1513 = vld [vmem:[%s1263 + $0x3c] sm:$0xf]
      %v1514 = vld [vmem:[%s1263 + $0x40] sm:$0xf]
      %v1515 = vld [vmem:[%s1263 + $0x44] sm:$0xf]
      %v1516 = vld [vmem:[%s1263 + $0x48] sm:$0xf]
      %v1517 = vld [vmem:[%s1263 + $0x4c] sm:$0xf]
      %v1518 = vld [vmem:[%s1263 + $0x50] sm:$0xf]
      %v1519 = vld [vmem:[%s1263 + $0x54] sm:$0xf]
      %v1520 = vld [vmem:[%s1263 + $0x58] sm:$0xf]
      %v1521 = vld [vmem:[%s1263 + $0x5c] sm:$0xf]
      %v1522 = vld [vmem:[%s1263 + $0x60] sm:$0xf]
      %v1523 = vld [vmem:[%s1263 + $0x64] sm:$0xf]
      %v1524 = vld [vmem:[%s1263 + $0x68] sm:$0xf]
      %v1525 = vld [vmem:[%s1263 + $0x6c] sm:$0xf]
      %s1526 = scalar_lea.vmem %s1, 24
      %v1527 = vld [vmem:[%s1526] sm:$0xf]
      %v1555 = vunpack.c.l.b16 %v1499
      %v1556 = vunpack.c.l.b16 %v1500
      %v1557 = vunpack.c.l.b16 %v1501
      %v1558 = vunpack.c.l.b16 %v1502
      %v1559 = vunpack.c.l.b16 %v1503
      %v1560 = vunpack.c.l.b16 %v1504
      %v1561 = vunpack.c.l.b16 %v1505
      %v1562 = vunpack.c.l.b16 %v1506
      %v1563 = vunpack.c.l.b16 %v1507
      %v1564 = vunpack.c.l.b16 %v1508
      %v1565 = vunpack.c.l.b16 %v1509
      %v1566 = vunpack.c.l.b16 %v1510
      %v1567 = vunpack.c.l.b16 %v1511
      %v1568 = vunpack.c.l.b16 %v1512
      %v1569 = vunpack.c.l.b16 %v1513
      %v1570 = vunpack.c.l.b16 %v1514
      %v1571 = vunpack.c.l.b16 %v1515
      %v1572 = vunpack.c.l.b16 %v1516
      %v1573 = vunpack.c.l.b16 %v1517
      %v1574 = vunpack.c.l.b16 %v1518
      %v1575 = vunpack.c.l.b16 %v1519
      %v1576 = vunpack.c.l.b16 %v1520
      %v1577 = vunpack.c.l.b16 %v1521
      %v1578 = vunpack.c.l.b16 %v1522
      %v1579 = vunpack.c.l.b16 %v1523
      %v1580 = vunpack.c.l.b16 %v1524
      %v1581 = vunpack.c.l.b16 %v1525
      %v1582 = vpack.c.b16 %v1556, %v1555
      %v1583 = vpack.c.b16 %v1558, %v1557
      %v1584 = vpack.c.b16 %v1560, %v1559
      %v1585 = vpack.c.b16 %v1562, %v1561
      %v1586 = vpack.c.b16 %v1564, %v1563
      %v1587 = vpack.c.b16 %v1566, %v1565
      %v1588 = vpack.c.b16 %v1568, %v1567
      %v1589 = vpack.c.b16 %v1570, %v1569
      %v1590 = vpack.c.b16 %v1572, %v1571
      %v1591 = vpack.c.b16 %v1574, %v1573
      %v1592 = vpack.c.b16 %v1576, %v1575
      %v1593 = vpack.c.b16 %v1578, %v1577
      %v1594 = vpack.c.b16 %v1580, %v1579
      %v1595 = vpack.c.b16 %v1581, %v1581
      %vm1596 = vcmask 1045504
      %v1597 = vrot.slane %v1582, 2
      %v1598 = vrot.slane %v1583, 2
      %v1599 = vsel %vm1596, %v1597, %v1598
      %v1600 = vrot.slane %v1584, 2
      %v1601 = vsel %vm1596, %v1598, %v1600
      %v1602 = vrot.slane %v1585, 2
      %v1603 = vsel %vm1596, %v1600, %v1602
      %v1604 = vrot.slane %v1586, 2
      %v1605 = vsel %vm1596, %v1602, %v1604
      %v1606 = vrot.slane %v1587, 2
      %v1607 = vsel %vm1596, %v1604, %v1606
      %v1608 = vrot.slane %v1588, 2
      %v1609 = vsel %vm1596, %v1606, %v1608
      %v1610 = vrot.slane %v1589, 2
      %v1611 = vsel %vm1596, %v1608, %v1610
      %v1612 = vrot.slane %v1590, 2
      %v1613 = vsel %vm1596, %v1610, %v1612
      %v1614 = vrot.slane %v1591, 2
      %v1615 = vsel %vm1596, %v1612, %v1614
      %v1616 = vrot.slane %v1592, 2
      %v1617 = vsel %vm1596, %v1614, %v1616
      %v1618 = vrot.slane %v1593, 2
      %v1619 = vsel %vm1596, %v1616, %v1618
      %v1620 = vrot.slane %v1594, 2
      %v1621 = vsel %vm1596, %v1618, %v1620
      %v1622 = vrot.slane %v1595, 2
      %v1623 = vsel %vm1596, %v1620, %v1622
      %v1625 = vsel %vm408, %v1599, 0
      %v1628 = vsel %vm408, %v1601, 0
      %v1631 = vsel %vm408, %v1603, 0
      %v1634 = vsel %vm408, %v1605, 0
      %v1637 = vsel %vm408, %v1607, 0
      %v1640 = vsel %vm408, %v1609, 0
      %v1643 = vsel %vm408, %v1611, 0
      %v1646 = vsel %vm408, %v1613, 0
      %v1649 = vsel %vm408, %v1615, 0
      %v1652 = vsel %vm408, %v1617, 0
      %v1655 = vsel %vm408, %v1619, 0
      %v1658 = vsel %vm408, %v1621, 0
      %v1661 = vsel %vm408, %v1623, 0
      %v1664 = vsel %vm448, %v1527, 0
      %1666 = vmatpush.bf16.msra.mxu0 0
      %1667 = vmatpush.bf16.msra.mxu0 0
      %1668 = vmatpush.bf16.msra.mxu0 0
      %1669 = vmatpush.bf16.msra.mxu0 0
      %1670 = vmatpush.bf16.msra.mxu0 0
      %1671 = vmatpush.bf16.msra.mxu0 0
      %1672 = vmatpush.bf16.msra.mxu0 0
      %1673 = vmatpush.bf16.msra.mxu0 %v1664
      %1674 = vmatmul.bf16.gmra.mxu0 %v1625
      %v1675 = vpop.f32.mrf.mxu0
      %v1676 = vadd.f32 0.0, %v1675
      %v1677 = vpop.f32.mrf.mxu0
      %v1678 = vadd.f32 0.0, %v1677
      %1679 = vmatmul.bf16.gmra.mxu0 %v1628
      %v1680 = vpop.f32.mrf.mxu0
      %v1681 = vadd.f32 0.0, %v1680
      %v1682 = vpop.f32.mrf.mxu0
      %v1683 = vadd.f32 0.0, %v1682
      %1684 = vmatmul.bf16.gmra.mxu0 %v1631
      %v1685 = vpop.f32.mrf.mxu0
      %v1686 = vadd.f32 0.0, %v1685
      %v1687 = vpop.f32.mrf.mxu0
      %v1688 = vadd.f32 0.0, %v1687
      %1689 = vmatmul.bf16.gmra.mxu0 %v1634
      %v1690 = vpop.f32.mrf.mxu0
      %v1691 = vadd.f32 0.0, %v1690
      %v1692 = vpop.f32.mrf.mxu0
      %v1693 = vadd.f32 0.0, %v1692
      %1694 = vmatmul.bf16.gmra.mxu0 %v1637
      %v1695 = vpop.f32.mrf.mxu0
      %v1696 = vadd.f32 0.0, %v1695
      %v1697 = vpop.f32.mrf.mxu0
      %v1698 = vadd.f32 0.0, %v1697
      %1699 = vmatmul.bf16.gmra.mxu0 %v1640
      %v1700 = vpop.f32.mrf.mxu0
      %v1701 = vadd.f32 0.0, %v1700
      %v1702 = vpop.f32.mrf.mxu0
      %v1703 = vadd.f32 0.0, %v1702
      %1704 = vmatmul.bf16.gmra.mxu0 %v1643
      %v1705 = vpop.f32.mrf.mxu0
      %v1706 = vadd.f32 0.0, %v1705
      %v1707 = vpop.f32.mrf.mxu0
      %v1708 = vadd.f32 0.0, %v1707
      %1709 = vmatmul.bf16.gmra.mxu0 %v1646
      %v1710 = vpop.f32.mrf.mxu0
      %v1711 = vadd.f32 0.0, %v1710
      %v1712 = vpop.f32.mrf.mxu0
      %v1713 = vadd.f32 0.0, %v1712
      %1714 = vmatmul.bf16.gmra.mxu0 %v1649
      %v1715 = vpop.f32.mrf.mxu0
      %v1716 = vadd.f32 0.0, %v1715
      %v1717 = vpop.f32.mrf.mxu0
      %v1718 = vadd.f32 0.0, %v1717
      %1719 = vmatmul.bf16.gmra.mxu0 %v1652
      %v1720 = vpop.f32.mrf.mxu0
      %v1721 = vadd.f32 0.0, %v1720
      %v1722 = vpop.f32.mrf.mxu0
      %v1723 = vadd.f32 0.0, %v1722
      %1724 = vmatmul.bf16.gmra.mxu0 %v1655
      %v1725 = vpop.f32.mrf.mxu0
      %v1726 = vadd.f32 0.0, %v1725
      %v1727 = vpop.f32.mrf.mxu0
      %v1728 = vadd.f32 0.0, %v1727
      %1729 = vmatmul.bf16.gmra.mxu0 %v1658
      %v1730 = vpop.f32.mrf.mxu0
      %v1731 = vadd.f32 0.0, %v1730
      %v1732 = vpop.f32.mrf.mxu0
      %v1733 = vadd.f32 0.0, %v1732
      %1734 = vmatmul.bf16.gmra.mxu0 %v1661
      %v1735 = vpop.f32.mrf.mxu0
      %v1736 = vadd.f32 0.0, %v1735
      %v1737 = vpop.f32.mrf.mxu0
      %v1738 = vadd.f32 0.0, %v1737
      %1739 = vdwg.mxu0
      %v1740 = vadd.f32 %v1473, %v1676
      %v1741 = vadd.f32 %v1474, %v1678
      %v1742 = vadd.f32 %v1475, %v1681
      %v1743 = vadd.f32 %v1476, %v1683
      %v1744 = vadd.f32 %v1477, %v1686
      %v1745 = vadd.f32 %v1478, %v1688
      %v1746 = vadd.f32 %v1479, %v1691
      %v1747 = vadd.f32 %v1480, %v1693
      %v1748 = vadd.f32 %v1481, %v1696
      %v1749 = vadd.f32 %v1482, %v1698
      %v1750 = vadd.f32 %v1483, %v1701
      %v1751 = vadd.f32 %v1484, %v1703
      %v1752 = vadd.f32 %v1485, %v1706
      %v1753 = vadd.f32 %v1486, %v1708
      %v1754 = vadd.f32 %v1487, %v1711
      %v1755 = vadd.f32 %v1488, %v1713
      %v1756 = vadd.f32 %v1489, %v1716
      %v1757 = vadd.f32 %v1490, %v1718
      %v1758 = vadd.f32 %v1491, %v1721
      %v1759 = vadd.f32 %v1492, %v1723
      %v1760 = vadd.f32 %v1493, %v1726
      %v1761 = vadd.f32 %v1494, %v1728
      %v1762 = vadd.f32 %v1495, %v1731
      %v1763 = vadd.f32 %v1496, %v1733
      %v1764 = vadd.f32 %v1497, %v1736
      %v1765 = vadd.f32 %v1498, %v1738
      %s1766 = scalar_lea.vmem %s1, 28
      %v1767 = vld [vmem:[%s1766] sm:$0xf]
      %vm1768 = vsmask.f32 5376
      %v1770 = vshrl.u32 %v1582, 16
      %v1772 = vrot.slane %v1770, 2
      %v1773 = vshll.u32 %v1582, 16
      %v1775 = vrot.slane %v1773, 3
      %v1776 = vor.u32 %v1772, %v1775
      %v1778 = vshrl.u32 %v1583, 16
      %v1780 = vrot.slane %v1778, 2
      %v1781 = vshll.u32 %v1583, 16
      %v1783 = vrot.slane %v1781, 3
      %v1784 = vor.u32 %v1780, %v1783
      %v1785 = vsel %vm1768, %v1776, %v1784
      %v1787 = vshrl.u32 %v1584, 16
      %v1789 = vrot.slane %v1787, 2
      %v1790 = vshll.u32 %v1584, 16
      %v1792 = vrot.slane %v1790, 3
      %v1793 = vor.u32 %v1789, %v1792
      %v1794 = vsel %vm1768, %v1784, %v1793
      %v1796 = vshrl.u32 %v1585, 16
      %v1798 = vrot.slane %v1796, 2
      %v1799 = vshll.u32 %v1585, 16
      %v1801 = vrot.slane %v1799, 3
      %v1802 = vor.u32 %v1798, %v1801
      %v1803 = vsel %vm1768, %v1793, %v1802
      %v1805 = vshrl.u32 %v1586, 16
      %v1807 = vrot.slane %v1805, 2
      %v1808 = vshll.u32 %v1586, 16
      %v1810 = vrot.slane %v1808, 3
      %v1811 = vor.u32 %v1807, %v1810
      %v1812 = vsel %vm1768, %v1802, %v1811
      %v1814 = vshrl.u32 %v1587, 16
      %v1816 = vrot.slane %v1814, 2
      %v1817 = vshll.u32 %v1587, 16
      %v1819 = vrot.slane %v1817, 3
      %v1820 = vor.u32 %v1816, %v1819
      %v1821 = vsel %vm1768, %v1811, %v1820
      %v1823 = vshrl.u32 %v1588, 16
      %v1825 = vrot.slane %v1823, 2
      %v1826 = vshll.u32 %v1588, 16
      %v1828 = vrot.slane %v1826, 3
      %v1829 = vor.u32 %v1825, %v1828
      %v1830 = vsel %vm1768, %v1820, %v1829
      %v1832 = vshrl.u32 %v1589, 16
      %v1834 = vrot.slane %v1832, 2
      %v1835 = vshll.u32 %v1589, 16
      %v1837 = vrot.slane %v1835, 3
      %v1838 = vor.u32 %v1834, %v1837
      %v1839 = vsel %vm1768, %v1829, %v1838
      %v1841 = vshrl.u32 %v1590, 16
      %v1843 = vrot.slane %v1841, 2
      %v1844 = vshll.u32 %v1590, 16
      %v1846 = vrot.slane %v1844, 3
      %v1847 = vor.u32 %v1843, %v1846
      %v1848 = vsel %vm1768, %v1838, %v1847
      %v1850 = vshrl.u32 %v1591, 16
      %v1852 = vrot.slane %v1850, 2
      %v1853 = vshll.u32 %v1591, 16
      %v1855 = vrot.slane %v1853, 3
      %v1856 = vor.u32 %v1852, %v1855
      %v1857 = vsel %vm1768, %v1847, %v1856
      %v1859 = vshrl.u32 %v1592, 16
      %v1861 = vrot.slane %v1859, 2
      %v1862 = vshll.u32 %v1592, 16
      %v1864 = vrot.slane %v1862, 3
      %v1865 = vor.u32 %v1861, %v1864
      %v1866 = vsel %vm1768, %v1856, %v1865
      %v1868 = vshrl.u32 %v1593, 16
      %v1870 = vrot.slane %v1868, 2
      %v1871 = vshll.u32 %v1593, 16
      %v1873 = vrot.slane %v1871, 3
      %v1874 = vor.u32 %v1870, %v1873
      %v1875 = vsel %vm1768, %v1865, %v1874
      %v1877 = vshrl.u32 %v1594, 16
      %v1879 = vrot.slane %v1877, 2
      %v1880 = vshll.u32 %v1594, 16
      %v1882 = vrot.slane %v1880, 3
      %v1883 = vor.u32 %v1879, %v1882
      %v1884 = vsel %vm1768, %v1874, %v1883
      %v1886 = vshrl.u32 %v1595, 16
      %v1888 = vrot.slane %v1886, 2
      %v1889 = vshll.u32 %v1595, 16
      %v1891 = vrot.slane %v1889, 3
      %v1892 = vor.u32 %v1888, %v1891
      %v1893 = vsel %vm1768, %v1883, %v1892
      %v1895 = vsel %vm408, %v1785, 0
      %v1898 = vsel %vm408, %v1794, 0
      %v1901 = vsel %vm408, %v1803, 0
      %v1904 = vsel %vm408, %v1812, 0
      %v1907 = vsel %vm408, %v1821, 0
      %v1910 = vsel %vm408, %v1830, 0
      %v1913 = vsel %vm408, %v1839, 0
      %v1916 = vsel %vm408, %v1848, 0
      %v1919 = vsel %vm408, %v1857, 0
      %v1922 = vsel %vm408, %v1866, 0
      %v1925 = vsel %vm408, %v1875, 0
      %v1928 = vsel %vm408, %v1884, 0
      %v1931 = vsel %vm408, %v1893, 0
      %v1934 = vsel %vm448, %v1767, 0
      %1936 = vmatpush.bf16.msra.mxu0 0
      %1937 = vmatpush.bf16.msra.mxu0 0
      %1938 = vmatpush.bf16.msra.mxu0 0
      %1939 = vmatpush.bf16.msra.mxu0 0
      %1940 = vmatpush.bf16.msra.mxu0 0
      %1941 = vmatpush.bf16.msra.mxu0 0
      %1942 = vmatpush.bf16.msra.mxu0 0
      %1943 = vmatpush.bf16.msra.mxu0 %v1934
      %1944 = vmatmul.bf16.gmra.mxu0 %v1895
      %v1945 = vpop.f32.mrf.mxu0
      %v1946 = vadd.f32 0.0, %v1945
      %v1947 = vpop.f32.mrf.mxu0
      %v1948 = vadd.f32 0.0, %v1947
      %1949 = vmatmul.bf16.gmra.mxu0 %v1898
      %v1950 = vpop.f32.mrf.mxu0
      %v1951 = vadd.f32 0.0, %v1950
      %v1952 = vpop.f32.mrf.mxu0
      %v1953 = vadd.f32 0.0, %v1952
      %1954 = vmatmul.bf16.gmra.mxu0 %v1901
      %v1955 = vpop.f32.mrf.mxu0
      %v1956 = vadd.f32 0.0, %v1955
      %v1957 = vpop.f32.mrf.mxu0
      %v1958 = vadd.f32 0.0, %v1957
      %1959 = vmatmul.bf16.gmra.mxu0 %v1904
      %v1960 = vpop.f32.mrf.mxu0
      %v1961 = vadd.f32 0.0, %v1960
      %v1962 = vpop.f32.mrf.mxu0
      %v1963 = vadd.f32 0.0, %v1962
      %1964 = vmatmul.bf16.gmra.mxu0 %v1907
      %v1965 = vpop.f32.mrf.mxu0
      %v1966 = vadd.f32 0.0, %v1965
      %v1967 = vpop.f32.mrf.mxu0
      %v1968 = vadd.f32 0.0, %v1967
      %1969 = vmatmul.bf16.gmra.mxu0 %v1910
      %v1970 = vpop.f32.mrf.mxu0
      %v1971 = vadd.f32 0.0, %v1970
      %v1972 = vpop.f32.mrf.mxu0
      %v1973 = vadd.f32 0.0, %v1972
      %1974 = vmatmul.bf16.gmra.mxu0 %v1913
      %v1975 = vpop.f32.mrf.mxu0
      %v1976 = vadd.f32 0.0, %v1975
      %v1977 = vpop.f32.mrf.mxu0
      %v1978 = vadd.f32 0.0, %v1977
      %1979 = vmatmul.bf16.gmra.mxu0 %v1916
      %v1980 = vpop.f32.mrf.mxu0
      %v1981 = vadd.f32 0.0, %v1980
      %v1982 = vpop.f32.mrf.mxu0
      %v1983 = vadd.f32 0.0, %v1982
      %1984 = vmatmul.bf16.gmra.mxu0 %v1919
      %v1985 = vpop.f32.mrf.mxu0
      %v1986 = vadd.f32 0.0, %v1985
      %v1987 = vpop.f32.mrf.mxu0
      %v1988 = vadd.f32 0.0, %v1987
      %1989 = vmatmul.bf16.gmra.mxu0 %v1922
      %v1990 = vpop.f32.mrf.mxu0
      %v1991 = vadd.f32 0.0, %v1990
      %v1992 = vpop.f32.mrf.mxu0
      %v1993 = vadd.f32 0.0, %v1992
      %1994 = vmatmul.bf16.gmra.mxu0 %v1925
      %v1995 = vpop.f32.mrf.mxu0
      %v1996 = vadd.f32 0.0, %v1995
      %v1997 = vpop.f32.mrf.mxu0
      %v1998 = vadd.f32 0.0, %v1997
      %1999 = vmatmul.bf16.gmra.mxu0 %v1928
      %v2000 = vpop.f32.mrf.mxu0
      %v2001 = vadd.f32 0.0, %v2000
      %v2002 = vpop.f32.mrf.mxu0
      %v2003 = vadd.f32 0.0, %v2002
      %2004 = vmatmul.bf16.gmra.mxu0 %v1931
      %v2005 = vpop.f32.mrf.mxu0
      %v2006 = vadd.f32 0.0, %v2005
      %v2007 = vpop.f32.mrf.mxu0
      %v2008 = vadd.f32 0.0, %v2007
      %2009 = vdwg.mxu0
      %v2010 = vadd.f32 %v1740, %v1946
      %v2011 = vadd.f32 %v1741, %v1948
      %v2012 = vadd.f32 %v1742, %v1951
      %v2013 = vadd.f32 %v1743, %v1953
      %v2014 = vadd.f32 %v1744, %v1956
      %v2015 = vadd.f32 %v1745, %v1958
      %v2016 = vadd.f32 %v1746, %v1961
      %v2017 = vadd.f32 %v1747, %v1963
      %v2018 = vadd.f32 %v1748, %v1966
      %v2019 = vadd.f32 %v1749, %v1968
      %v2020 = vadd.f32 %v1750, %v1971
      %v2021 = vadd.f32 %v1751, %v1973
      %v2022 = vadd.f32 %v1752, %v1976
      %v2023 = vadd.f32 %v1753, %v1978
      %v2024 = vadd.f32 %v1754, %v1981
      %v2025 = vadd.f32 %v1755, %v1983
      %v2026 = vadd.f32 %v1756, %v1986
      %v2027 = vadd.f32 %v1757, %v1988
      %v2028 = vadd.f32 %v1758, %v1991
      %v2029 = vadd.f32 %v1759, %v1993
      %v2030 = vadd.f32 %v1760, %v1996
      %v2031 = vadd.f32 %v1761, %v1998
      %v2032 = vadd.f32 %v1762, %v2001
      %v2033 = vadd.f32 %v1763, %v2003
      %v2034 = vadd.f32 %v1764, %v2006
      %v2035 = vadd.f32 %v1765, %v2008
      %s2036 = scalar_lea.vmem %s1, 32
      %v2037 = vld [vmem:[%s2036] sm:$0xf]
      %v2038 = vrot.slane %v1582, 3
      %v2039 = vrot.slane %v1583, 3
      %v2040 = vsel %vm819, %v2038, %v2039
      %v2041 = vrot.slane %v1584, 3
      %v2042 = vsel %vm819, %v2039, %v2041
      %v2043 = vrot.slane %v1585, 3
      %v2044 = vsel %vm819, %v2041, %v2043
      %v2045 = vrot.slane %v1586, 3
      %v2046 = vsel %vm819, %v2043, %v2045
      %v2047 = vrot.slane %v1587, 3
      %v2048 = vsel %vm819, %v2045, %v2047
      %v2049 = vrot.slane %v1588, 3
      %v2050 = vsel %vm819, %v2047, %v2049
      %v2051 = vrot.slane %v1589, 3
      %v2052 = vsel %vm819, %v2049, %v2051
      %v2053 = vrot.slane %v1590, 3
      %v2054 = vsel %vm819, %v2051, %v2053
      %v2055 = vrot.slane %v1591, 3
      %v2056 = vsel %vm819, %v2053, %v2055
      %v2057 = vrot.slane %v1592, 3
      %v2058 = vsel %vm819, %v2055, %v2057
      %v2059 = vrot.slane %v1593, 3
      %v2060 = vsel %vm819, %v2057, %v2059
      %v2061 = vrot.slane %v1594, 3
      %v2062 = vsel %vm819, %v2059, %v2061
      %v2063 = vrot.slane %v1595, 3
      %v2064 = vsel %vm819, %v2061, %v2063
      %v2066 = vsel %vm408, %v2040, 0
      %v2069 = vsel %vm408, %v2042, 0
      %v2072 = vsel %vm408, %v2044, 0
      %v2075 = vsel %vm408, %v2046, 0
      %v2078 = vsel %vm408, %v2048, 0
      %v2081 = vsel %vm408, %v2050, 0
      %v2084 = vsel %vm408, %v2052, 0
      %v2087 = vsel %vm408, %v2054, 0
      %v2090 = vsel %vm408, %v2056, 0
      %v2093 = vsel %vm408, %v2058, 0
      %v2096 = vsel %vm408, %v2060, 0
      %v2099 = vsel %vm408, %v2062, 0
      %v2102 = vsel %vm408, %v2064, 0
      %v2105 = vsel %vm448, %v2037, 0
      %2107 = vmatpush.bf16.msra.mxu0 0
      %2108 = vmatpush.bf16.msra.mxu0 0
      %2109 = vmatpush.bf16.msra.mxu0 0
      %2110 = vmatpush.bf16.msra.mxu0 0
      %2111 = vmatpush.bf16.msra.mxu0 0
      %2112 = vmatpush.bf16.msra.mxu0 0
      %2113 = vmatpush.bf16.msra.mxu0 0
      %2114 = vmatpush.bf16.msra.mxu0 %v2105
      %2115 = vmatmul.bf16.gmra.mxu0 %v2066
      %v2116 = vpop.f32.mrf.mxu0
      %v2117 = vadd.f32 0.0, %v2116
      %v2118 = vpop.f32.mrf.mxu0
      %v2119 = vadd.f32 0.0, %v2118
      %2120 = vmatmul.bf16.gmra.mxu0 %v2069
      %v2121 = vpop.f32.mrf.mxu0
      %v2122 = vadd.f32 0.0, %v2121
      %v2123 = vpop.f32.mrf.mxu0
      %v2124 = vadd.f32 0.0, %v2123
      %2125 = vmatmul.bf16.gmra.mxu0 %v2072
      %v2126 = vpop.f32.mrf.mxu0
      %v2127 = vadd.f32 0.0, %v2126
      %v2128 = vpop.f32.mrf.mxu0
      %v2129 = vadd.f32 0.0, %v2128
      %2130 = vmatmul.bf16.gmra.mxu0 %v2075
      %v2131 = vpop.f32.mrf.mxu0
      %v2132 = vadd.f32 0.0, %v2131
      %v2133 = vpop.f32.mrf.mxu0
      %v2134 = vadd.f32 0.0, %v2133
      %2135 = vmatmul.bf16.gmra.mxu0 %v2078
      %v2136 = vpop.f32.mrf.mxu0
      %v2137 = vadd.f32 0.0, %v2136
      %v2138 = vpop.f32.mrf.mxu0
      %v2139 = vadd.f32 0.0, %v2138
      %2140 = vmatmul.bf16.gmra.mxu0 %v2081
      %v2141 = vpop.f32.mrf.mxu0
      %v2142 = vadd.f32 0.0, %v2141
      %v2143 = vpop.f32.mrf.mxu0
      %v2144 = vadd.f32 0.0, %v2143
      %2145 = vmatmul.bf16.gmra.mxu0 %v2084
      %v2146 = vpop.f32.mrf.mxu0
      %v2147 = vadd.f32 0.0, %v2146
      %v2148 = vpop.f32.mrf.mxu0
      %v2149 = vadd.f32 0.0, %v2148
      %2150 = vmatmul.bf16.gmra.mxu0 %v2087
      %v2151 = vpop.f32.mrf.mxu0
      %v2152 = vadd.f32 0.0, %v2151
      %v2153 = vpop.f32.mrf.mxu0
      %v2154 = vadd.f32 0.0, %v2153
      %2155 = vmatmul.bf16.gmra.mxu0 %v2090
      %v2156 = vpop.f32.mrf.mxu0
      %v2157 = vadd.f32 0.0, %v2156
      %v2158 = vpop.f32.mrf.mxu0
      %v2159 = vadd.f32 0.0, %v2158
      %2160 = vmatmul.bf16.gmra.mxu0 %v2093
      %v2161 = vpop.f32.mrf.mxu0
      %v2162 = vadd.f32 0.0, %v2161
      %v2163 = vpop.f32.mrf.mxu0
      %v2164 = vadd.f32 0.0, %v2163
      %2165 = vmatmul.bf16.gmra.mxu0 %v2096
      %v2166 = vpop.f32.mrf.mxu0
      %v2167 = vadd.f32 0.0, %v2166
      %v2168 = vpop.f32.mrf.mxu0
      %v2169 = vadd.f32 0.0, %v2168
      %2170 = vmatmul.bf16.gmra.mxu0 %v2099
      %v2171 = vpop.f32.mrf.mxu0
      %v2172 = vadd.f32 0.0, %v2171
      %v2173 = vpop.f32.mrf.mxu0
      %v2174 = vadd.f32 0.0, %v2173
      %2175 = vmatmul.bf16.gmra.mxu0 %v2102
      %v2176 = vpop.f32.mrf.mxu0
      %v2177 = vadd.f32 0.0, %v2176
      %v2178 = vpop.f32.mrf.mxu0
      %v2179 = vadd.f32 0.0, %v2178
      %2180 = vdwg.mxu0
      %v2181 = vadd.f32 %v2010, %v2117
      %v2182 = vadd.f32 %v2011, %v2119
      %v2183 = vadd.f32 %v2012, %v2122
      %v2184 = vadd.f32 %v2013, %v2124
      %v2185 = vadd.f32 %v2014, %v2127
      %v2186 = vadd.f32 %v2015, %v2129
      %v2187 = vadd.f32 %v2016, %v2132
      %v2188 = vadd.f32 %v2017, %v2134
      %v2189 = vadd.f32 %v2018, %v2137
      %v2190 = vadd.f32 %v2019, %v2139
      %v2191 = vadd.f32 %v2020, %v2142
      %v2192 = vadd.f32 %v2021, %v2144
      %v2193 = vadd.f32 %v2022, %v2147
      %v2194 = vadd.f32 %v2023, %v2149
      %v2195 = vadd.f32 %v2024, %v2152
      %v2196 = vadd.f32 %v2025, %v2154
      %v2197 = vadd.f32 %v2026, %v2157
      %v2198 = vadd.f32 %v2027, %v2159
      %v2199 = vadd.f32 %v2028, %v2162
      %v2200 = vadd.f32 %v2029, %v2164
      %v2201 = vadd.f32 %v2030, %v2167
      %v2202 = vadd.f32 %v2031, %v2169
      %v2203 = vadd.f32 %v2032, %v2172
      %v2204 = vadd.f32 %v2033, %v2174
      %v2205 = vadd.f32 %v2034, %v2177
      %v2206 = vadd.f32 %v2035, %v2179
      %v2207 = vld [vmem:[%s2] sm:$0x1]
      %v2209 = vperm.slane %v2207, 0
      %v2211 = vadd.f32 %v2181, %v2209
      %v2212 = vadd.f32 %v2182, %v2209
      %v2213 = vadd.f32 %v2183, %v2209
      %v2214 = vadd.f32 %v2184, %v2209
      %v2215 = vadd.f32 %v2185, %v2209
      %v2216 = vadd.f32 %v2186, %v2209
      %v2217 = vadd.f32 %v2187, %v2209
      %v2218 = vadd.f32 %v2188, %v2209
      %v2219 = vadd.f32 %v2189, %v2209
      %v2220 = vadd.f32 %v2190, %v2209
      %v2221 = vadd.f32 %v2191, %v2209
      %v2222 = vadd.f32 %v2192, %v2209
      %v2223 = vadd.f32 %v2193, %v2209
      %v2224 = vadd.f32 %v2194, %v2209
      %v2225 = vadd.f32 %v2195, %v2209
      %v2226 = vadd.f32 %v2196, %v2209
      %v2227 = vadd.f32 %v2197, %v2209
      %v2228 = vadd.f32 %v2198, %v2209
      %v2229 = vadd.f32 %v2199, %v2209
      %v2230 = vadd.f32 %v2200, %v2209
      %v2231 = vadd.f32 %v2201, %v2209
      %v2232 = vadd.f32 %v2202, %v2209
      %v2233 = vadd.f32 %v2203, %v2209
      %v2234 = vadd.f32 %v2204, %v2209
      %v2235 = vadd.f32 %v2205, %v2209
      %v2236 = vadd.f32 %v2206, %v2209
      %v2237 = vadd.f32 %v2211, 3.0
      %v2238 = vadd.f32 %v2212, 3.0
      %v2239 = vadd.f32 %v2213, 3.0
      %v2240 = vadd.f32 %v2214, 3.0
      %v2241 = vadd.f32 %v2215, 3.0
      %v2242 = vadd.f32 %v2216, 3.0
      %v2243 = vadd.f32 %v2217, 3.0
      %v2244 = vadd.f32 %v2218, 3.0
      %v2245 = vadd.f32 %v2219, 3.0
      %v2246 = vadd.f32 %v2220, 3.0
      %v2247 = vadd.f32 %v2221, 3.0
      %v2248 = vadd.f32 %v2222, 3.0
      %v2249 = vadd.f32 %v2223, 3.0
      %v2250 = vadd.f32 %v2224, 3.0
      %v2251 = vadd.f32 %v2225, 3.0
      %v2252 = vadd.f32 %v2226, 3.0
      %v2253 = vadd.f32 %v2227, 3.0
      %v2254 = vadd.f32 %v2228, 3.0
      %v2255 = vadd.f32 %v2229, 3.0
      %v2256 = vadd.f32 %v2230, 3.0
      %v2257 = vadd.f32 %v2231, 3.0
      %v2258 = vadd.f32 %v2232, 3.0
      %v2259 = vadd.f32 %v2233, 3.0
      %v2260 = vadd.f32 %v2234, 3.0
      %v2261 = vadd.f32 %v2235, 3.0
      %v2262 = vadd.f32 %v2236, 3.0
      %v2263 = vmax.f32 %v2237, 0.0
      %v2264 = vmax.f32 %v2238, 0.0
      %v2265 = vmax.f32 %v2239, 0.0
      %v2266 = vmax.f32 %v2240, 0.0
      %v2267 = vmax.f32 %v2241, 0.0
      %v2268 = vmax.f32 %v2242, 0.0
      %v2269 = vmax.f32 %v2243, 0.0
      %v2270 = vmax.f32 %v2244, 0.0
      %v2271 = vmax.f32 %v2245, 0.0
      %v2272 = vmax.f32 %v2246, 0.0
      %v2273 = vmax.f32 %v2247, 0.0
      %v2274 = vmax.f32 %v2248, 0.0
      %v2275 = vmax.f32 %v2249, 0.0
      %v2276 = vmax.f32 %v2250, 0.0
      %v2277 = vmax.f32 %v2251, 0.0
      %v2278 = vmax.f32 %v2252, 0.0
      %v2279 = vmax.f32 %v2253, 0.0
      %v2280 = vmax.f32 %v2254, 0.0
      %v2281 = vmax.f32 %v2255, 0.0
      %v2282 = vmax.f32 %v2256, 0.0
      %v2283 = vmax.f32 %v2257, 0.0
      %v2284 = vmax.f32 %v2258, 0.0
      %v2285 = vmax.f32 %v2259, 0.0
      %v2286 = vmax.f32 %v2260, 0.0
      %v2287 = vmax.f32 %v2261, 0.0
      %v2288 = vmax.f32 %v2262, 0.0
      %v2289 = vmin.f32 %v2263, 6.0
      %v2290 = vmin.f32 %v2264, 6.0
      %v2291 = vmin.f32 %v2265, 6.0
      %v2292 = vmin.f32 %v2266, 6.0
      %v2293 = vmin.f32 %v2267, 6.0
      %v2294 = vmin.f32 %v2268, 6.0
      %v2295 = vmin.f32 %v2269, 6.0
      %v2296 = vmin.f32 %v2270, 6.0
      %v2297 = vmin.f32 %v2271, 6.0
      %v2298 = vmin.f32 %v2272, 6.0
      %v2299 = vmin.f32 %v2273, 6.0
      %v2300 = vmin.f32 %v2274, 6.0
      %v2301 = vmin.f32 %v2275, 6.0
      %v2302 = vmin.f32 %v2276, 6.0
      %v2303 = vmin.f32 %v2277, 6.0
      %v2304 = vmin.f32 %v2278, 6.0
      %v2305 = vmin.f32 %v2279, 6.0
      %v2306 = vmin.f32 %v2280, 6.0
      %v2307 = vmin.f32 %v2281, 6.0
      %v2308 = vmin.f32 %v2282, 6.0
      %v2309 = vmin.f32 %v2283, 6.0
      %v2310 = vmin.f32 %v2284, 6.0
      %v2311 = vmin.f32 %v2285, 6.0
      %v2312 = vmin.f32 %v2286, 6.0
      %v2313 = vmin.f32 %v2287, 6.0
      %v2314 = vmin.f32 %v2288, 6.0
      %v2315 = vmul.f32 %v2211, %v2289
      %v2316 = vmul.f32 %v2212, %v2290
      %v2317 = vmul.f32 %v2213, %v2291
      %v2318 = vmul.f32 %v2214, %v2292
      %v2319 = vmul.f32 %v2215, %v2293
      %v2320 = vmul.f32 %v2216, %v2294
      %v2321 = vmul.f32 %v2217, %v2295
      %v2322 = vmul.f32 %v2218, %v2296
      %v2323 = vmul.f32 %v2219, %v2297
      %v2324 = vmul.f32 %v2220, %v2298
      %v2325 = vmul.f32 %v2221, %v2299
      %v2326 = vmul.f32 %v2222, %v2300
      %v2327 = vmul.f32 %v2223, %v2301
      %v2328 = vmul.f32 %v2224, %v2302
      %v2329 = vmul.f32 %v2225, %v2303
      %v2330 = vmul.f32 %v2226, %v2304
      %v2331 = vmul.f32 %v2227, %v2305
      %v2332 = vmul.f32 %v2228, %v2306
      %v2333 = vmul.f32 %v2229, %v2307
      %v2334 = vmul.f32 %v2230, %v2308
      %v2335 = vmul.f32 %v2231, %v2309
      %v2336 = vmul.f32 %v2232, %v2310
      %v2337 = vmul.f32 %v2233, %v2311
      %v2338 = vmul.f32 %v2234, %v2312
      %v2339 = vmul.f32 %v2235, %v2313
      %v2340 = vmul.f32 %v2236, %v2314
      %v2341 = vmul.f32 %v2315, 0.16666667
      %v2342 = vmul.f32 %v2316, 0.16666667
      %v2343 = vmul.f32 %v2317, 0.16666667
      %v2344 = vmul.f32 %v2318, 0.16666667
      %v2345 = vmul.f32 %v2319, 0.16666667
      %v2346 = vmul.f32 %v2320, 0.16666667
      %v2347 = vmul.f32 %v2321, 0.16666667
      %v2348 = vmul.f32 %v2322, 0.16666667
      %v2349 = vmul.f32 %v2323, 0.16666667
      %v2350 = vmul.f32 %v2324, 0.16666667
      %v2351 = vmul.f32 %v2325, 0.16666667
      %v2352 = vmul.f32 %v2326, 0.16666667
      %v2353 = vmul.f32 %v2327, 0.16666667
      %v2354 = vmul.f32 %v2328, 0.16666667
      %v2355 = vmul.f32 %v2329, 0.16666667
      %v2356 = vmul.f32 %v2330, 0.16666667
      %v2357 = vmul.f32 %v2331, 0.16666667
      %v2358 = vmul.f32 %v2332, 0.16666667
      %v2359 = vmul.f32 %v2333, 0.16666667
      %v2360 = vmul.f32 %v2334, 0.16666667
      %v2361 = vmul.f32 %v2335, 0.16666667
      %v2362 = vmul.f32 %v2336, 0.16666667
      %v2363 = vmul.f32 %v2337, 0.16666667
      %v2364 = vmul.f32 %v2338, 0.16666667
      %v2365 = vmul.f32 %v2339, 0.16666667
      %v2366 = vmul.f32 %v2340, 0.16666667
      %v2367 = vpack.c.bf16 %v2341, %v2341
      %v2368 = vpack.c.bf16 %v2342, %v2342
      %v2369 = vpack.c.bf16 %v2343, %v2343
      %v2370 = vpack.c.bf16 %v2344, %v2344
      %v2371 = vpack.c.bf16 %v2345, %v2345
      %v2372 = vpack.c.bf16 %v2346, %v2346
      %v2373 = vpack.c.bf16 %v2347, %v2347
      %v2374 = vpack.c.bf16 %v2348, %v2348
      %v2375 = vpack.c.bf16 %v2349, %v2349
      %v2376 = vpack.c.bf16 %v2350, %v2350
      %v2377 = vpack.c.bf16 %v2351, %v2351
      %v2378 = vpack.c.bf16 %v2352, %v2352
      %v2379 = vpack.c.bf16 %v2353, %v2353
      %v2380 = vpack.c.bf16 %v2354, %v2354
      %v2381 = vpack.c.bf16 %v2355, %v2355
      %v2382 = vpack.c.bf16 %v2356, %v2356
      %v2383 = vpack.c.bf16 %v2357, %v2357
      %v2384 = vpack.c.bf16 %v2358, %v2358
      %v2385 = vpack.c.bf16 %v2359, %v2359
      %v2386 = vpack.c.bf16 %v2360, %v2360
      %v2387 = vpack.c.bf16 %v2361, %v2361
      %v2388 = vpack.c.bf16 %v2362, %v2362
      %v2389 = vpack.c.bf16 %v2363, %v2363
      %v2390 = vpack.c.bf16 %v2364, %v2364
      %v2391 = vpack.c.bf16 %v2365, %v2365
      %v2392 = vpack.c.bf16 %v2366, %v2366
      %vm2393 = vcmask 125952
      %2394 = vst.msk [vmem:[%s192] sm:$0xf] %vm2393, %v2367
      %2395 = vst.msk [vmem:[%s192 + $0x4] sm:$0xf] %vm2393, %v2368
      %2396 = vst.msk [vmem:[%s192 + $0x8] sm:$0xf] %vm2393, %v2369
      %2397 = vst.msk [vmem:[%s192 + $0xc] sm:$0xf] %vm2393, %v2370
      %2398 = vst.msk [vmem:[%s192 + $0x10] sm:$0xf] %vm2393, %v2371
      %2399 = vst.msk [vmem:[%s192 + $0x14] sm:$0xf] %vm2393, %v2372
      %2400 = vst.msk [vmem:[%s192 + $0x18] sm:$0xf] %vm2393, %v2373
      %2401 = vst.msk [vmem:[%s192 + $0x1c] sm:$0xf] %vm2393, %v2374
      %2402 = vst.msk [vmem:[%s192 + $0x20] sm:$0xf] %vm2393, %v2375
      %2403 = vst.msk [vmem:[%s192 + $0x24] sm:$0xf] %vm2393, %v2376
      %2404 = vst.msk [vmem:[%s192 + $0x28] sm:$0xf] %vm2393, %v2377
      %2405 = vst.msk [vmem:[%s192 + $0x2c] sm:$0xf] %vm2393, %v2378
      %2406 = vst.msk [vmem:[%s192 + $0x30] sm:$0xf] %vm2393, %v2379
      %2407 = vst.msk [vmem:[%s192 + $0x34] sm:$0xf] %vm2393, %v2380
      %2408 = vst.msk [vmem:[%s192 + $0x38] sm:$0xf] %vm2393, %v2381
      %2409 = vst.msk [vmem:[%s192 + $0x3c] sm:$0xf] %vm2393, %v2382
      %2410 = vst.msk [vmem:[%s192 + $0x40] sm:$0xf] %vm2393, %v2383
      %2411 = vst.msk [vmem:[%s192 + $0x44] sm:$0xf] %vm2393, %v2384
      %2412 = vst.msk [vmem:[%s192 + $0x48] sm:$0xf] %vm2393, %v2385
      %2413 = vst.msk [vmem:[%s192 + $0x4c] sm:$0xf] %vm2393, %v2386
      %2414 = vst.msk [vmem:[%s192 + $0x50] sm:$0xf] %vm2393, %v2387
      %2415 = vst.msk [vmem:[%s192 + $0x54] sm:$0xf] %vm2393, %v2388
      %2416 = vst.msk [vmem:[%s192 + $0x58] sm:$0xf] %vm2393, %v2389
      %2417 = vst.msk [vmem:[%s192 + $0x5c] sm:$0xf] %vm2393, %v2390
      %2418 = vst.msk [vmem:[%s192 + $0x60] sm:$0xf] %vm2393, %v2391
      %2419 = vst.msk [vmem:[%s192 + $0x64] sm:$0xf] %vm2393, %v2392
      %s2420 = smul.u32 26, %s19
      %p2421 = scmp.lt.s32.totalorder %s18, 1
      %s2422 = scalar_select %p2421, %s18, 1
      %p2423 = scmp.lt.s32.totalorder %s2420, 25
      %s2424 = scalar_select %p2423, %s2420, 25
      %s2425 = smul.addr %s2422, 26
      %s2426 = sadd.s32 %s2424, %s2425
      %s2427 = smul.addr %s2426, 4
      %s2428 = scalar_lea.vmem %s3, %s2427
      // Predicated region
      $region33: #{tpu_custom_call.1} parent=31 // pred_check
        %p2429 = pneg %p114
      $region34: #{tpu_custom_call.1} parent=31 // pred_check_branch
        %2431 = sbr.rel (%p2429) target = $region36
      $region35: #{tpu_custom_call.1} parent=31 // pred_region
        %s2432 = smul.u32 26, %s19
      $region36: #{tpu_custom_call.1} parent=31 // pred_fallthru
        _
    $region32: #{tpu_custom_call.1} parent=5 // pred_fallthru
      _
    %p2433 = scmp.le.s32.totalorder 2, %s9
    // Predicated region
    $region37: #{tpu_custom_call.1} parent=5 // pred_check
      %p2434 = pneg %p2433
    $region38: #{tpu_custom_call.1} parent=5 // pred_check_branch
      %2436 = sbr.rel (%p2434) target = $region40
    $region39: #{tpu_custom_call.1} parent=5 // pred_region
      %s2437 = ssub.s32 %s9, 2
      // Predicated region
      $region41: #{tpu_custom_call.1} parent=39 // pred_check
        %p2438 = pneg %p120
      $region42: #{tpu_custom_call.1} parent=39 // pred_check_branch
        %2440 = sbr.rel (%p2438) target = $region44
      $region43: #{tpu_custom_call.1} parent=39 // pred_region
        %s2441 = smul.u32 26, %s21
        %p2442 = scmp.lt.s32.totalorder %s20, 1
        %s2443 = scalar_select %p2442, %s20, 1
        %p2444 = scmp.lt.s32.totalorder %s2441, 25
        %s2445 = scalar_select %p2444, %s2441, 25
        %s2446 = smul.addr %s2443, 26
        %s2447 = sadd.s32 %s2445, %s2446
        %s2448 = smul.addr %s2447, 4
        %s2449 = scalar_lea.vmem %s3, %s2448
      $region44: #{tpu_custom_call.1} parent=39 // pred_fallthru
        _
    $region40: #{tpu_custom_call.1} parent=5 // pred_fallthru
      _
  $region6: #{tpu_custom_call.1} parent=0 // loop_footer
    %s13 = sadd.s32 1, %s9
  $region7: #{tpu_custom_call.1} parent=0 // loop_footer_branch
    %8 = sbr.rel target = $region3
  $region8: #{tpu_custom_call.1} parent=0 // loop_exit
    _

</llo_original>
